<compile_context>
chip_gen: v6e
topology: v6e:2x2x1
jax: 0.10.0
libtpu: 0.0.40
codegen_flags: <defaults>
</compile_context>

<pallas_src>
import math

import jax
import jax.numpy as jnp
from jax import lax
from jax.experimental import pallas as pl
from jax.experimental.pallas import tpu as pltpu

TOKENS_MLP_DIM = 16
CHANNELS_MLP_DIM = 128
LN_EPS = 1e-5


def _gelu_exact(x):
    # nn.GELU() default = exact erf formulation
    return 0.5 * x * (1.0 + lax.erf(x * (1.0 / math.sqrt(2.0))))


def _layernorm(x, gamma, beta):
    # normalize over last dim (D); works for both 2-D and 3-D x
    mu = jnp.mean(x, axis=-1, keepdims=True)
    xc = x - mu
    var = jnp.mean(xc * xc, axis=-1, keepdims=True)
    inv = lax.rsqrt(var + LN_EPS)
    return xc * inv * gamma + beta


def mixer_layer_kernel(
    x_ref,                       # (TB, S, D)
    g1_ref, b1_ref,              # (1, D)            layernorm_token
    wt1t_ref, bt1_ref,           # (16, S), (16, 1)  token-mix fc1 (pre-transposed)
    wt2t_ref, bt2_ref,           # (S, 16), (S, 1)   token-mix fc2 (pre-transposed)
    g2_ref, b2_ref,              # (1, D)            layernorm_channel
    wc1_ref, bc1_ref,            # (D, 128), (1, 128) channel-mix fc1
    wc2_ref, bc2_ref,            # (128, D), (1, D)   channel-mix fc2
    o_ref,                       # (TB, S, D)
):
    TB, S, D = x_ref.shape
    K = wt1t_ref.shape[0]        # tokens_mlp_dim

    x = x_ref[...].astype(jnp.float32)                             # (TB, S, D)

    # ---------- token mixing (D stays lane-dense; no activation transposes) ----------
    y = _layernorm(x, g1_ref[...], b1_ref[...])                    # (TB, S, D)

    wt1b = jnp.broadcast_to(wt1t_ref[...][None], (TB, K, S))       # (TB, K, S)
    h = jnp.einsum('bks,bsd->bkd', wt1b, y,
                   preferred_element_type=jnp.float32) + bt1_ref[...]   # (TB, K, D)
    h = _gelu_exact(h)

    wt2b = jnp.broadcast_to(wt2t_ref[...][None], (TB, S, K))       # (TB, S, K)
    t = jnp.einsum('bsk,bkd->bsd', wt2b, h,
                   preferred_element_type=jnp.float32) + bt2_ref[...]   # (TB, S, D)
    x = x + t                                                      # residual 1

    # ---------- channel mixing on the folded (TB*S, D) slab ----------
    x2 = x.reshape(TB * S, D)                                      # free leading-dim fold
    z = _layernorm(x2, g2_ref[...], b2_ref[...])                   # (TB*S, D)
    h2 = jnp.dot(z, wc1_ref[...],
                 preferred_element_type=jnp.float32) + bc1_ref[...]     # (TB*S, 128)
    h2 = _gelu_exact(h2)
    c = jnp.dot(h2, wc2_ref[...],
                preferred_element_type=jnp.float32) + bc2_ref[...]      # (TB*S, D)
    out = x2 + c                                                   # residual 2

    o_ref[...] = out.reshape(TB, S, D).astype(o_ref.dtype)


def mixer_layer(x, params, *, block_batch=4):
    B, S, D = x.shape
    tb = max(1, math.gcd(B, block_batch))   # batch block size (divides B)
    grid = (B // tb,)

    # Host-side layout plumbing (free): pre-transpose token-mix weights so the
    # kernel keeps D on the lane axis; biases become (rows, 1) sublane vectors.
    weights = (
        params["g1"], params["b1"],
        params["wt1"].T, params["bt1"].reshape(-1, 1),
        params["wt2"].T, params["bt2"].reshape(-1, 1),
        params["g2"], params["b2"],
        params["wc1"], params["bc1"],
        params["wc2"], params["bc2"],
    )
    full = lambda a: pl.BlockSpec(a.shape, lambda i: (0,) * a.ndim)

    return pl.pallas_call(
        mixer_layer_kernel,
        out_shape=jax.ShapeDtypeStruct((B, S, D), x.dtype),
        grid_spec=pltpu.PrefetchScalarGridSpec(
            num_scalar_prefetch=0,
            grid=grid,
            in_specs=[pl.BlockSpec((tb, S, D), lambda i: (i, 0, 0))]
                     + [full(w) for w in weights],
            out_specs=pl.BlockSpec((tb, S, D), lambda i: (i, 0, 0)),
        ),
        # Output reuses the input HBM buffer (residual-style in-place update).
        input_output_aliases={0: 0},
        compiler_params=pltpu.CompilerParams(
            dimension_semantics=("parallel",)),
    )(x, *weights)


def init_params(key, patch_size, hidden_dim):
    S, D = patch_size, hidden_dim
    ks = jax.random.split(key, 8)

    def linear(k, fan_in, fan_out):
        # PyTorch-style uniform(-1/sqrt(fan_in), 1/sqrt(fan_in)); stored as (in, out)
        bound = 1.0 / math.sqrt(fan_in)
        kw, kb = jax.random.split(k)
        w = jax.random.uniform(kw, (fan_in, fan_out), jnp.float32, -bound, bound)
        b = jax.random.uniform(kb, (1, fan_out), jnp.float32, -bound, bound)
        return w, b

    wt1, bt1 = linear(ks[0], S, TOKENS_MLP_DIM)
    wt2, bt2 = linear(ks[1], TOKENS_MLP_DIM, S)
    wc1, bc1 = linear(ks[2], D, CHANNELS_MLP_DIM)
    wc2, bc2 = linear(ks[3], CHANNELS_MLP_DIM, D)

    return dict(
        g1=jnp.ones((1, D), jnp.float32), b1=jnp.zeros((1, D), jnp.float32),
        wt1=wt1, bt1=bt1, wt2=wt2, bt2=bt2,
        g2=jnp.ones((1, D), jnp.float32), b2=jnp.zeros((1, D), jnp.float32),
        wc1=wc1, bc1=bc1, wc2=wc2, bc2=bc2,
    )


def mixer_layer_ref(x, p):
    # pure-JAX reference mirroring the PyTorch module
    y = _layernorm(x, p["g1"], p["b1"])
    yt = jnp.swapaxes(y, 1, 2)                                    # (B, D, S)
    t = _gelu_exact(yt @ p["wt1"] + p["bt1"]) @ p["wt2"] + p["bt2"]
    x = x + jnp.swapaxes(t, 1, 2)
    z = _layernorm(x, p["g2"], p["b2"])
    c = _gelu_exact(z @ p["wc1"] + p["bc1"]) @ p["wc2"] + p["bc2"]
    return x + c


if __name__ == "__main__":
    # batch=8 (so the batched grid still has >=2 parallel steps), patch_size=8, hidden_dim=32
    B, S, D = 8, 8, 32
    key = jax.random.PRNGKey(0)
    kx, kp = jax.random.split(key)
    x = jax.random.normal(kx, (B, S, D), jnp.float32)
    params = init_params(kp, S, D)

    # Compute the reference first: the kernel aliases/donates x's buffer.
    ref = jax.block_until_ready(mixer_layer_ref(x, params))

    out = mixer_layer(x, params, block_batch=4)   # grid = (2,), block = (4, 8, 32)
    out = jax.block_until_ready(out)

    assert out.shape == (B, S, D)
    assert jnp.allclose(out, ref, atol=1e-4, rtol=1e-4), "mismatch vs JAX reference"
    print("KERNEL_OK")
</pallas_src>

<mosaic_0001>
module attributes {stable_mosaic.version = 11 : i64} {
  func.func @mixer_layer_kernel(%arg0: i32, %arg1: memref<4x8x32xf32, #tpu.memory_space<vmem>>, %arg2: memref<1x32xf32, #tpu.memory_space<vmem>>, %arg3: memref<1x32xf32, #tpu.memory_space<vmem>>, %arg4: memref<16x8xf32, #tpu.memory_space<vmem>>, %arg5: memref<16x1xf32, #tpu.memory_space<vmem>>, %arg6: memref<8x16xf32, #tpu.memory_space<vmem>>, %arg7: memref<8x1xf32, #tpu.memory_space<vmem>>, %arg8: memref<1x32xf32, #tpu.memory_space<vmem>>, %arg9: memref<1x32xf32, #tpu.memory_space<vmem>>, %arg10: memref<32x128xf32, #tpu.memory_space<vmem>>, %arg11: memref<1x128xf32, #tpu.memory_space<vmem>>, %arg12: memref<128x32xf32, #tpu.memory_space<vmem>>, %arg13: memref<1x32xf32, #tpu.memory_space<vmem>>, %arg14: memref<4x8x32xf32, #tpu.memory_space<vmem>>) attributes {dimension_semantics = [#tpu.dimension_semantics<parallel>], iteration_bounds = array<i64: 2>, scalar_prefetch = 0 : i64, scratch_operands = 0 : i64, tpu.core_type = #tpu.core_type<tc>, window_params = [{transform_indices = @transform_0, window_bounds = array<i64: 4, 8, 32>}, {pipeline_mode = #tpu.pipeline_mode<synchronous>, transform_indices = @transform_1, window_bounds = array<i64: 1, 32>}, {pipeline_mode = #tpu.pipeline_mode<synchronous>, transform_indices = @transform_2, window_bounds = array<i64: 1, 32>}, {pipeline_mode = #tpu.pipeline_mode<synchronous>, transform_indices = @transform_3, window_bounds = array<i64: 16, 8>}, {pipeline_mode = #tpu.pipeline_mode<synchronous>, transform_indices = @transform_4, window_bounds = array<i64: 16, 1>}, {pipeline_mode = #tpu.pipeline_mode<synchronous>, transform_indices = @transform_5, window_bounds = array<i64: 8, 16>}, {pipeline_mode = #tpu.pipeline_mode<synchronous>, transform_indices = @transform_6, window_bounds = array<i64: 8, 1>}, {pipeline_mode = #tpu.pipeline_mode<synchronous>, transform_indices = @transform_7, window_bounds = array<i64: 1, 32>}, {pipeline_mode = #tpu.pipeline_mode<synchronous>, transform_indices = @transform_8, window_bounds = array<i64: 1, 32>}, {pipeline_mode = #tpu.pipeline_mode<synchronous>, transform_indices = @transform_9, window_bounds = array<i64: 32, 128>}, {pipeline_mode = #tpu.pipeline_mode<synchronous>, transform_indices = @transform_10, window_bounds = array<i64: 1, 128>}, {pipeline_mode = #tpu.pipeline_mode<synchronous>, transform_indices = @transform_11, window_bounds = array<i64: 128, 32>}, {pipeline_mode = #tpu.pipeline_mode<synchronous>, transform_indices = @transform_12, window_bounds = array<i64: 1, 32>}, {transform_indices = @transform_13, window_bounds = array<i64: 4, 8, 32>}]} {
    %c0 = arith.constant 0 : index
    %c0_0 = arith.constant 0 : index
    %c0_1 = arith.constant 0 : index
    %0 = vector.load %arg1[%c0, %c0_0, %c0_1] : memref<4x8x32xf32, #tpu.memory_space<vmem>>, vector<4x8x32xf32>
    %c0_2 = arith.constant 0 : index
    %c0_3 = arith.constant 0 : index
    %1 = vector.load %arg2[%c0_2, %c0_3] : memref<1x32xf32, #tpu.memory_space<vmem>>, vector<1x32xf32>
    %c0_4 = arith.constant 0 : index
    %c0_5 = arith.constant 0 : index
    %2 = vector.load %arg3[%c0_4, %c0_5] : memref<1x32xf32, #tpu.memory_space<vmem>>, vector<1x32xf32>
    %cst = arith.constant dense<0.000000e+00> : vector<4x8xf32>
    %3 = vector.multi_reduction <add>, %0, %cst [2] : vector<4x8x32xf32> to vector<4x8xf32>
    %4 = vector.shape_cast %3 : vector<4x8xf32> to vector<4x8x1xf32>
    %cst_6 = arith.constant 3.200000e+01 : f32
    %5 = vector.broadcast %cst_6 : f32 to vector<4x8x1xf32>
    %6 = arith.divf %4, %5 : vector<4x8x1xf32>
    %7 = vector.broadcast %6 : vector<4x8x1xf32> to vector<4x8x32xf32>
    %8 = arith.subf %0, %7 : vector<4x8x32xf32>
    %9 = arith.mulf %8, %8 : vector<4x8x32xf32>
    %cst_7 = arith.constant dense<0.000000e+00> : vector<4x8xf32>
    %10 = vector.multi_reduction <add>, %9, %cst_7 [2] : vector<4x8x32xf32> to vector<4x8xf32>
    %11 = vector.shape_cast %10 : vector<4x8xf32> to vector<4x8x1xf32>
    %cst_8 = arith.constant 3.200000e+01 : f32
    %12 = vector.broadcast %cst_8 : f32 to vector<4x8x1xf32>
    %13 = arith.divf %11, %12 : vector<4x8x1xf32>
    %cst_9 = arith.constant 9.99999974E-6 : f32
    %14 = vector.broadcast %cst_9 : f32 to vector<4x8x1xf32>
    %15 = arith.addf %13, %14 : vector<4x8x1xf32>
    %16 = math.rsqrt %15 : vector<4x8x1xf32>
    %17 = vector.broadcast %16 : vector<4x8x1xf32> to vector<4x8x32xf32>
    %18 = arith.mulf %8, %17 : vector<4x8x32xf32>
    %19 = vector.shape_cast %1 : vector<1x32xf32> to vector<1x1x32xf32>
    %20 = vector.broadcast %19 : vector<1x1x32xf32> to vector<4x8x32xf32>
    %21 = arith.mulf %18, %20 : vector<4x8x32xf32>
    %22 = vector.shape_cast %2 : vector<1x32xf32> to vector<1x1x32xf32>
    %23 = vector.broadcast %22 : vector<1x1x32xf32> to vector<4x8x32xf32>
    %24 = arith.addf %21, %23 : vector<4x8x32xf32>
    %c0_10 = arith.constant 0 : index
    %c0_11 = arith.constant 0 : index
    %25 = vector.load %arg4[%c0_10, %c0_11] : memref<16x8xf32, #tpu.memory_space<vmem>>, vector<16x8xf32>
    %26 = vector.shape_cast %25 : vector<16x8xf32> to vector<1x16x8xf32>
    %27 = vector.shape_cast %26 : vector<1x16x8xf32> to vector<1x16x8xf32>
    %28 = vector.broadcast %27 : vector<1x16x8xf32> to vector<4x16x8xf32>
    "tpu.trace_start"() <{level = 10 : i32, message = "bks,bsd->bkd"}> : () -> ()
    %cst_12 = arith.constant dense<0.000000e+00> : vector<4x16x32xf32>
    %29 = tpu.matmul %28, %24, %cst_12 {dimension_numbers = #tpu.dot_dimension_numbers<[2], [1], [1], [2], [0, 0, 0, 1, 1, 2], [0], [0]>} : vector<4x16x8xf32>, vector<4x8x32xf32>, vector<4x16x32xf32> -> vector<4x16x32xf32>
    "tpu.trace_stop"() : () -> ()
    %c0_13 = arith.constant 0 : index
    %c0_14 = arith.constant 0 : index
    %30 = vector.load %arg5[%c0_13, %c0_14] : memref<16x1xf32, #tpu.memory_space<vmem>>, vector<16x1xf32>
    %31 = vector.shape_cast %30 : vector<16x1xf32> to vector<1x16x1xf32>
    %32 = vector.broadcast %31 : vector<1x16x1xf32> to vector<4x16x32xf32>
    %33 = arith.addf %29, %32 : vector<4x16x32xf32>
    %cst_15 = arith.constant 5.000000e-01 : f32
    %34 = vector.broadcast %cst_15 : f32 to vector<4x16x32xf32>
    %35 = arith.mulf %34, %33 : vector<4x16x32xf32>
    %cst_16 = arith.constant 0.707106769 : f32
    %36 = vector.broadcast %cst_16 : f32 to vector<4x16x32xf32>
    %37 = arith.mulf %33, %36 : vector<4x16x32xf32>
    %38 = math.erf %37 : vector<4x16x32xf32>
    %cst_17 = arith.constant 1.000000e+00 : f32
    %39 = vector.broadcast %cst_17 : f32 to vector<4x16x32xf32>
    %40 = arith.addf %39, %38 : vector<4x16x32xf32>
    %41 = arith.mulf %35, %40 : vector<4x16x32xf32>
    %c0_18 = arith.constant 0 : index
    %c0_19 = arith.constant 0 : index
    %42 = vector.load %arg6[%c0_18, %c0_19] : memref<8x16xf32, #tpu.memory_space<vmem>>, vector<8x16xf32>
    %43 = vector.shape_cast %42 : vector<8x16xf32> to vector<1x8x16xf32>
    %44 = vector.shape_cast %43 : vector<1x8x16xf32> to vector<1x8x16xf32>
    %45 = vector.broadcast %44 : vector<1x8x16xf32> to vector<4x8x16xf32>
    "tpu.trace_start"() <{level = 10 : i32, message = "bsk,bkd->bsd"}> : () -> ()
    %cst_20 = arith.constant dense<0.000000e+00> : vector<4x8x32xf32>
    %46 = tpu.matmul %45, %41, %cst_20 {dimension_numbers = #tpu.dot_dimension_numbers<[2], [1], [1], [2], [0, 0, 0, 1, 1, 2], [0], [0]>} : vector<4x8x16xf32>, vector<4x16x32xf32>, vector<4x8x32xf32> -> vector<4x8x32xf32>
    "tpu.trace_stop"() : () -> ()
    %c0_21 = arith.constant 0 : index
    %c0_22 = arith.constant 0 : index
    %47 = vector.load %arg7[%c0_21, %c0_22] : memref<8x1xf32, #tpu.memory_space<vmem>>, vector<8x1xf32>
    %48 = vector.shape_cast %47 : vector<8x1xf32> to vector<1x8x1xf32>
    %49 = vector.broadcast %48 : vector<1x8x1xf32> to vector<4x8x32xf32>
    %50 = arith.addf %46, %49 : vector<4x8x32xf32>
    %51 = arith.addf %0, %50 : vector<4x8x32xf32>
    %52 = vector.shape_cast %51 : vector<4x8x32xf32> to vector<32x32xf32>
    %c0_23 = arith.constant 0 : index
    %c0_24 = arith.constant 0 : index
    %53 = vector.load %arg8[%c0_23, %c0_24] : memref<1x32xf32, #tpu.memory_space<vmem>>, vector<1x32xf32>
    %c0_25 = arith.constant 0 : index
    %c0_26 = arith.constant 0 : index
    %54 = vector.load %arg9[%c0_25, %c0_26] : memref<1x32xf32, #tpu.memory_space<vmem>>, vector<1x32xf32>
    %cst_27 = arith.constant dense<0.000000e+00> : vector<32xf32>
    %55 = vector.multi_reduction <add>, %52, %cst_27 [1] : vector<32x32xf32> to vector<32xf32>
    %56 = vector.shape_cast %55 : vector<32xf32> to vector<32x1xf32>
    %cst_28 = arith.constant 3.200000e+01 : f32
    %57 = vector.broadcast %cst_28 : f32 to vector<32x1xf32>
    %58 = arith.divf %56, %57 : vector<32x1xf32>
    %59 = vector.broadcast %58 : vector<32x1xf32> to vector<32x32xf32>
    %60 = arith.subf %52, %59 : vector<32x32xf32>
    %61 = arith.mulf %60, %60 : vector<32x32xf32>
    %cst_29 = arith.constant dense<0.000000e+00> : vector<32xf32>
    %62 = vector.multi_reduction <add>, %61, %cst_29 [1] : vector<32x32xf32> to vector<32xf32>
    %63 = vector.shape_cast %62 : vector<32xf32> to vector<32x1xf32>
    %cst_30 = arith.constant 3.200000e+01 : f32
    %64 = vector.broadcast %cst_30 : f32 to vector<32x1xf32>
    %65 = arith.divf %63, %64 : vector<32x1xf32>
    %cst_31 = arith.constant 9.99999974E-6 : f32
    %66 = vector.broadcast %cst_31 : f32 to vector<32x1xf32>
    %67 = arith.addf %65, %66 : vector<32x1xf32>
    %68 = math.rsqrt %67 : vector<32x1xf32>
    %69 = vector.broadcast %68 : vector<32x1xf32> to vector<32x32xf32>
    %70 = arith.mulf %60, %69 : vector<32x32xf32>
    %71 = vector.broadcast %53 : vector<1x32xf32> to vector<32x32xf32>
    %72 = arith.mulf %70, %71 : vector<32x32xf32>
    %73 = vector.broadcast %54 : vector<1x32xf32> to vector<32x32xf32>
    %74 = arith.addf %72, %73 : vector<32x32xf32>
    %c0_32 = arith.constant 0 : index
    %c0_33 = arith.constant 0 : index
    %75 = vector.load %arg10[%c0_32, %c0_33] : memref<32x128xf32, #tpu.memory_space<vmem>>, vector<32x128xf32>
    %cst_34 = arith.constant dense<0.000000e+00> : vector<32x128xf32>
    %76 = tpu.matmul %74, %75, %cst_34 {dimension_numbers = #tpu.dot_dimension_numbers<[1], [0], [0], [1], [0, 0, 1, 1], [], []>} : vector<32x32xf32>, vector<32x128xf32>, vector<32x128xf32> -> vector<32x128xf32>
    %c0_35 = arith.constant 0 : index
    %c0_36 = arith.constant 0 : index
    %77 = vector.load %arg11[%c0_35, %c0_36] : memref<1x128xf32, #tpu.memory_space<vmem>>, vector<1x128xf32>
    %78 = vector.broadcast %77 : vector<1x128xf32> to vector<32x128xf32>
    %79 = arith.addf %76, %78 : vector<32x128xf32>
    %cst_37 = arith.constant 5.000000e-01 : f32
    %80 = vector.broadcast %cst_37 : f32 to vector<32x128xf32>
    %81 = arith.mulf %80, %79 : vector<32x128xf32>
    %cst_38 = arith.constant 0.707106769 : f32
    %82 = vector.broadcast %cst_38 : f32 to vector<32x128xf32>
    %83 = arith.mulf %79, %82 : vector<32x128xf32>
    %84 = math.erf %83 : vector<32x128xf32>
    %cst_39 = arith.constant 1.000000e+00 : f32
    %85 = vector.broadcast %cst_39 : f32 to vector<32x128xf32>
    %86 = arith.addf %85, %84 : vector<32x128xf32>
    %87 = arith.mulf %81, %86 : vector<32x128xf32>
    %c0_40 = arith.constant 0 : index
    %c0_41 = arith.constant 0 : index
    %88 = vector.load %arg12[%c0_40, %c0_41] : memref<128x32xf32, #tpu.memory_space<vmem>>, vector<128x32xf32>
    %cst_42 = arith.constant dense<0.000000e+00> : vector<32x32xf32>
    %89 = tpu.matmul %87, %88, %cst_42 {dimension_numbers = #tpu.dot_dimension_numbers<[1], [0], [0], [1], [0, 0, 1, 1], [], []>} : vector<32x128xf32>, vector<128x32xf32>, vector<32x32xf32> -> vector<32x32xf32>
    %c0_43 = arith.constant 0 : index
    %c0_44 = arith.constant 0 : index
    %90 = vector.load %arg13[%c0_43, %c0_44] : memref<1x32xf32, #tpu.memory_space<vmem>>, vector<1x32xf32>
    %91 = vector.broadcast %90 : vector<1x32xf32> to vector<32x32xf32>
    %92 = arith.addf %89, %91 : vector<32x32xf32>
    %93 = arith.addf %52, %92 : vector<32x32xf32>
    %94 = vector.shape_cast %93 : vector<32x32xf32> to vector<4x8x32xf32>
    %c0_45 = arith.constant 0 : index
    %c0_46 = arith.constant 0 : index
    %c0_47 = arith.constant 0 : index
    %95 = vector.load %arg14[%c0_45, %c0_46, %c0_47] : memref<4x8x32xf32, #tpu.memory_space<vmem>>, vector<4x8x32xf32>
    tpu.vector_store %arg14[%c0_45, %c0_46, %c0_47], %94 {strides = array<i32>} : memref<4x8x32xf32, #tpu.memory_space<vmem>>, vector<4x8x32xf32>,
    return
  }
  func.func @transform_0(%arg0: i32) -> (i32, i32, i32) {
    %c0_i32 = arith.constant 0 : i32
    %c0_i32_0 = arith.constant 0 : i32
    %c0_i32_1 = arith.constant 0 : i32
    return %arg0, %c0_i32, %c0_i32_0 : i32, i32, i32
  }
  func.func @transform_1(%arg0: i32) -> (i32, i32) {
    %c0_i32 = arith.constant 0 : i32
    %c0_i32_0 = arith.constant 0 : i32
    %c0_i32_1 = arith.constant 0 : i32
    return %c0_i32, %c0_i32_0 : i32, i32
  }
  func.func @transform_2(%arg0: i32) -> (i32, i32) {
    %c0_i32 = arith.constant 0 : i32
    %c0_i32_0 = arith.constant 0 : i32
    %c0_i32_1 = arith.constant 0 : i32
    return %c0_i32, %c0_i32_0 : i32, i32
  }
  func.func @transform_3(%arg0: i32) -> (i32, i32) {
    %c0_i32 = arith.constant 0 : i32
    %c0_i32_0 = arith.constant 0 : i32
    %c0_i32_1 = arith.constant 0 : i32
    return %c0_i32, %c0_i32_0 : i32, i32
  }
  func.func @transform_4(%arg0: i32) -> (i32, i32) {
    %c0_i32 = arith.constant 0 : i32
    %c0_i32_0 = arith.constant 0 : i32
    %c0_i32_1 = arith.constant 0 : i32
    return %c0_i32, %c0_i32_0 : i32, i32
  }
  func.func @transform_5(%arg0: i32) -> (i32, i32) {
    %c0_i32 = arith.constant 0 : i32
    %c0_i32_0 = arith.constant 0 : i32
    %c0_i32_1 = arith.constant 0 : i32
    return %c0_i32, %c0_i32_0 : i32, i32
  }
  func.func @transform_6(%arg0: i32) -> (i32, i32) {
    %c0_i32 = arith.constant 0 : i32
    %c0_i32_0 = arith.constant 0 : i32
    %c0_i32_1 = arith.constant 0 : i32
    return %c0_i32, %c0_i32_0 : i32, i32
  }
  func.func @transform_7(%arg0: i32) -> (i32, i32) {
    %c0_i32 = arith.constant 0 : i32
    %c0_i32_0 = arith.constant 0 : i32
    %c0_i32_1 = arith.constant 0 : i32
    return %c0_i32, %c0_i32_0 : i32, i32
  }
  func.func @transform_8(%arg0: i32) -> (i32, i32) {
    %c0_i32 = arith.constant 0 : i32
    %c0_i32_0 = arith.constant 0 : i32
    %c0_i32_1 = arith.constant 0 : i32
    return %c0_i32, %c0_i32_0 : i32, i32
  }
  func.func @transform_9(%arg0: i32) -> (i32, i32) {
    %c0_i32 = arith.constant 0 : i32
    %c0_i32_0 = arith.constant 0 : i32
    %c0_i32_1 = arith.constant 0 : i32
    return %c0_i32, %c0_i32_0 : i32, i32
  }
  func.func @transform_10(%arg0: i32) -> (i32, i32) {
    %c0_i32 = arith.constant 0 : i32
    %c0_i32_0 = arith.constant 0 : i32
    %c0_i32_1 = arith.constant 0 : i32
    return %c0_i32, %c0_i32_0 : i32, i32
  }
  func.func @transform_11(%arg0: i32) -> (i32, i32) {
    %c0_i32 = arith.constant 0 : i32
    %c0_i32_0 = arith.constant 0 : i32
    %c0_i32_1 = arith.constant 0 : i32
    return %c0_i32, %c0_i32_0 : i32, i32
  }
  func.func @transform_12(%arg0: i32) -> (i32, i32) {
    %c0_i32 = arith.constant 0 : i32
    %c0_i32_0 = arith.constant 0 : i32
    %c0_i32_1 = arith.constant 0 : i32
    return %c0_i32, %c0_i32_0 : i32, i32
  }
  func.func @transform_13(%arg0: i32) -> (i32, i32, i32) {
    %c0_i32 = arith.constant 0 : i32
    %c0_i32_0 = arith.constant 0 : i32
    %c0_i32_1 = arith.constant 0 : i32
    return %arg0, %c0_i32, %c0_i32_0 : i32, i32, i32
  }
}

</mosaic_0001>

<llo_original>
// kernel: tpu_custom_call.1
$region0: #{tpu_custom_call.1}
  #allocation0 [shape = 'u32[]', space=smem, size = 0x4, offset = 0x4, fixed_abs, tag = 'smem constant byte address 0x4 - core index']
  #allocation1 [shape = 'u32[144,128]{1,0:T(1,128)}', space=vmem, size = 0x12000, scoped, tag = 'internal scratch']
  %s0 = inlined_call_operand.hbm [shape: f32[8,8,32], index: 0, kind: input, shape index: {}, may-alias: {0,13}]
  %s1 = inlined_call_operand.vmem [shape: f32[1,32], index: 1, kind: input, shape index: {}]
  %s2 = inlined_call_operand.vmem [shape: f32[1,32], index: 2, kind: input, shape index: {}]
  %s3 = inlined_call_operand.vmem [shape: f32[16,8], index: 3, kind: input, shape index: {}]
  %s4 = inlined_call_operand.vmem [shape: f32[16,1], index: 4, kind: input, shape index: {}]
  %s5 = inlined_call_operand.vmem [shape: f32[8,16], index: 5, kind: input, shape index: {}]
  %s6 = inlined_call_operand.vmem [shape: f32[8,1], index: 6, kind: input, shape index: {}]
  %s7 = inlined_call_operand.vmem [shape: f32[1,32], index: 7, kind: input, shape index: {}]
  %s8 = inlined_call_operand.vmem [shape: f32[1,32], index: 8, kind: input, shape index: {}]
  %s9 = inlined_call_operand.vmem [shape: f32[32,128], index: 9, kind: input, shape index: {}]
  %s10 = inlined_call_operand.vmem [shape: f32[1,128], index: 10, kind: input, shape index: {}]
  %s11 = inlined_call_operand.vmem [shape: f32[128,32], index: 11, kind: input, shape index: {}]
  %s12 = inlined_call_operand.vmem [shape: f32[1,32], index: 12, kind: input, shape index: {}]
  %s13 = inlined_call_operand.hbm [shape: f32[8,8,32], index: 13, kind: output, shape index: {}, may-alias: {0,13}]
  %s14 = sld [smem:[#allocation0]]
  $region89: #{tpu_custom_call.1} parent=0
    _
  %s16 = ssub.s32 1, %s14
  %s17 = scalar_select 0, %s16, %s14
  $region1: #{tpu_custom_call.1} parent=0
    #allocation2 [shape = 'u8[32768]{0}', space=vmem, size = 0x8000, scoped, tag = 'input window, operand 0']
    #allocation3 [shape = 's32[2]{0}', space=sflag, size = 0x8, scoped, tag = 'scoped memory for tpu_custom_call.1']
    #allocation4 [shape = 's32[2]{0}', space=sflag, size = 0x8, scoped, tag = 'scoped memory for tpu_custom_call.1']
    #allocation5 [shape = 'u8[32768]{0}', space=vmem, size = 0x8000, scoped, tag = 'output window, operand 0']
    %18 = vsyncpa [#allocation3], 0
    %s19 = scalar_lea.sflag [#allocation3], 1
    %20 = vsyncpa %s19, 0
    %21 = vsyncpa [#allocation4], 0
    %s22 = scalar_lea.sflag [#allocation4], 1
    %23 = vsyncpa %s22, 0
    loop: start=0, step=1, limit=4
    $region2: #{tpu_custom_call.1} parent=1 // loop_pre_header
      _
    $region3: #{tpu_custom_call.1} parent=1 // loop_header
      %s25 = sphi 0, %s29
      %p26 = scmp.ge.s32.totalorder %s25, 4
      %s35 = sphi 0, %s37
      %s38 = sphi 0, %s35
      %s39 = sphi 0, %s38
      %s55 = sphi 0, %s39
      %s59 = sphi 0, %s59
      %s61 = sphi 0, %s59
      %s62 = sphi 0, %s61
      %s76 = sphi 0, %s62
      %s80 = sphi 0, %s80
      %s82 = sphi 0, %s80
      %s83 = sphi 0, %s82
      %s97 = sphi 0, %s83
      %s101 = sphi 0, %s101
      %s103 = sphi 0, %s101
      %s104 = sphi 0, %s103
      %s118 = sphi 0, %s104
      %s122 = sphi 0, %s122
      %s124 = sphi 0, %s122
      %s125 = sphi 0, %s124
      %s139 = sphi 0, %s125
      %s143 = sphi 0, %s143
      %s145 = sphi 0, %s143
      %s146 = sphi 0, %s145
      %s160 = sphi 0, %s146
      %s164 = sphi 0, %s164
      %s166 = sphi 0, %s164
      %s167 = sphi 0, %s166
      %s181 = sphi 0, %s167
      %s185 = sphi 0, %s185
      %s187 = sphi 0, %s185
      %s188 = sphi 0, %s187
      %s202 = sphi 0, %s188
      %s206 = sphi 0, %s206
      %s208 = sphi 0, %s206
      %s209 = sphi 0, %s208
      %s223 = sphi 0, %s209
      %s227 = sphi 0, %s227
      %s229 = sphi 0, %s227
      %s230 = sphi 0, %s229
      %s244 = sphi 0, %s230
      %s248 = sphi 0, %s248
      %s250 = sphi 0, %s248
      %s251 = sphi 0, %s250
      %s265 = sphi 0, %s251
      %s269 = sphi 0, %s269
      %s271 = sphi 0, %s269
      %s272 = sphi 0, %s271
      %s286 = sphi 0, %s272
      %s290 = sphi 0, %s290
      %s292 = sphi 0, %s290
      %s293 = sphi 0, %s292
      %s307 = sphi 0, %s293
      %s313 = sphi 0, %s315
      %s316 = sphi 0, %s313
      %s317 = sphi 0, %s316
      %s333 = sphi 0, %s317
    $region4: #{tpu_custom_call.1} parent=1 // loop_header_branch
      %28 = sbr.rel (%p26) target = $region8
    $region5: #{tpu_custom_call.1} parent=1 // loop_body
      %s30 = ssub.s32 %s25, 1
      %s31 = ssub.s32 %s25, 2
      %s32 = sadd.s32 %s25, 1
      %s33 = ssub.s32 %s25, %s32
      %p34 = scmp.eq.s32.totalorder %s33, 0
      %s36 = sadd.s32 %s35, 1
      %s37 = scalar_select %p34, %s35, %s36
      %p40 = pneg %p34
      %p41 = scmp.eq.s32.totalorder %s25, 1
      %p42 = por %p40, %p41
      %p43 = scmp.ne.s32.totalorder %s35, %s38
      %p44 = scmp.eq.s32.totalorder %s25, 0
      %p45 = por %p43, %p44
      %p46 = scmp.ne.s32.totalorder %s35, %s38
      %p47 = scmp.eq.s32.totalorder %s30, 1
      %p48 = por %p46, %p47
      %p49 = scmp.ne.s32.totalorder %s38, %s39
      %p50 = scmp.eq.s32.totalorder %s30, 0
      %p51 = por %p49, %p50
      %p52 = scmp.ne.s32.totalorder %s38, %s39
      %p53 = scmp.eq.s32.totalorder %s31, 1
      %p54 = por %p52, %p53
      %p56 = scmp.ne.s32.totalorder %s39, %s55
      %p57 = scmp.eq.s32.totalorder %s31, 0
      %p58 = por %p56, %p57
      %s60 = sadd.s32 %s59, 1
      %p63 = scmp.eq.s32.totalorder %s25, 1
      %p64 = scmp.ne.s32.totalorder %s59, %s61
      %p65 = scmp.eq.s32.totalorder %s25, 0
      %p66 = por %p64, %p65
      %p67 = scmp.ne.s32.totalorder %s59, %s61
      %p68 = scmp.eq.s32.totalorder %s30, 1
      %p69 = por %p67, %p68
      %p70 = scmp.ne.s32.totalorder %s61, %s62
      %p71 = scmp.eq.s32.totalorder %s30, 0
      %p72 = por %p70, %p71
      %p73 = scmp.ne.s32.totalorder %s61, %s62
      %p74 = scmp.eq.s32.totalorder %s31, 1
      %p75 = por %p73, %p74
      %p77 = scmp.ne.s32.totalorder %s62, %s76
      %p78 = scmp.eq.s32.totalorder %s31, 0
      %p79 = por %p77, %p78
      %s81 = sadd.s32 %s80, 1
      %p84 = scmp.eq.s32.totalorder %s25, 1
      %p85 = scmp.ne.s32.totalorder %s80, %s82
      %p86 = scmp.eq.s32.totalorder %s25, 0
      %p87 = por %p85, %p86
      %p88 = scmp.ne.s32.totalorder %s80, %s82
      %p89 = scmp.eq.s32.totalorder %s30, 1
      %p90 = por %p88, %p89
      %p91 = scmp.ne.s32.totalorder %s82, %s83
      %p92 = scmp.eq.s32.totalorder %s30, 0
      %p93 = por %p91, %p92
      %p94 = scmp.ne.s32.totalorder %s82, %s83
      %p95 = scmp.eq.s32.totalorder %s31, 1
      %p96 = por %p94, %p95
      %p98 = scmp.ne.s32.totalorder %s83, %s97
      %p99 = scmp.eq.s32.totalorder %s31, 0
      %p100 = por %p98, %p99
      %s102 = sadd.s32 %s101, 1
      %p105 = scmp.eq.s32.totalorder %s25, 1
      %p106 = scmp.ne.s32.totalorder %s101, %s103
      %p107 = scmp.eq.s32.totalorder %s25, 0
      %p108 = por %p106, %p107
      %p109 = scmp.ne.s32.totalorder %s101, %s103
      %p110 = scmp.eq.s32.totalorder %s30, 1
      %p111 = por %p109, %p110
      %p112 = scmp.ne.s32.totalorder %s103, %s104
      %p113 = scmp.eq.s32.totalorder %s30, 0
      %p114 = por %p112, %p113
      %p115 = scmp.ne.s32.totalorder %s103, %s104
      %p116 = scmp.eq.s32.totalorder %s31, 1
      %p117 = por %p115, %p116
      %p119 = scmp.ne.s32.totalorder %s104, %s118
      %p120 = scmp.eq.s32.totalorder %s31, 0
      %p121 = por %p119, %p120
      %s123 = sadd.s32 %s122, 1
      %p126 = scmp.eq.s32.totalorder %s25, 1
      %p127 = scmp.ne.s32.totalorder %s122, %s124
      %p128 = scmp.eq.s32.totalorder %s25, 0
      %p129 = por %p127, %p128
      %p130 = scmp.ne.s32.totalorder %s122, %s124
      %p131 = scmp.eq.s32.totalorder %s30, 1
      %p132 = por %p130, %p131
      %p133 = scmp.ne.s32.totalorder %s124, %s125
      %p134 = scmp.eq.s32.totalorder %s30, 0
      %p135 = por %p133, %p134
      %p136 = scmp.ne.s32.totalorder %s124, %s125
      %p137 = scmp.eq.s32.totalorder %s31, 1
      %p138 = por %p136, %p137
      %p140 = scmp.ne.s32.totalorder %s125, %s139
      %p141 = scmp.eq.s32.totalorder %s31, 0
      %p142 = por %p140, %p141
      %s144 = sadd.s32 %s143, 1
      %p147 = scmp.eq.s32.totalorder %s25, 1
      %p148 = scmp.ne.s32.totalorder %s143, %s145
      %p149 = scmp.eq.s32.totalorder %s25, 0
      %p150 = por %p148, %p149
      %p151 = scmp.ne.s32.totalorder %s143, %s145
      %p152 = scmp.eq.s32.totalorder %s30, 1
      %p153 = por %p151, %p152
      %p154 = scmp.ne.s32.totalorder %s145, %s146
      %p155 = scmp.eq.s32.totalorder %s30, 0
      %p156 = por %p154, %p155
      %p157 = scmp.ne.s32.totalorder %s145, %s146
      %p158 = scmp.eq.s32.totalorder %s31, 1
      %p159 = por %p157, %p158
      %p161 = scmp.ne.s32.totalorder %s146, %s160
      %p162 = scmp.eq.s32.totalorder %s31, 0
      %p163 = por %p161, %p162
      %s165 = sadd.s32 %s164, 1
      %p168 = scmp.eq.s32.totalorder %s25, 1
      %p169 = scmp.ne.s32.totalorder %s164, %s166
      %p170 = scmp.eq.s32.totalorder %s25, 0
      %p171 = por %p169, %p170
      %p172 = scmp.ne.s32.totalorder %s164, %s166
      %p173 = scmp.eq.s32.totalorder %s30, 1
      %p174 = por %p172, %p173
      %p175 = scmp.ne.s32.totalorder %s166, %s167
      %p176 = scmp.eq.s32.totalorder %s30, 0
      %p177 = por %p175, %p176
      %p178 = scmp.ne.s32.totalorder %s166, %s167
      %p179 = scmp.eq.s32.totalorder %s31, 1
      %p180 = por %p178, %p179
      %p182 = scmp.ne.s32.totalorder %s167, %s181
      %p183 = scmp.eq.s32.totalorder %s31, 0
      %p184 = por %p182, %p183
      %s186 = sadd.s32 %s185, 1
      %p189 = scmp.eq.s32.totalorder %s25, 1
      %p190 = scmp.ne.s32.totalorder %s185, %s187
      %p191 = scmp.eq.s32.totalorder %s25, 0
      %p192 = por %p190, %p191
      %p193 = scmp.ne.s32.totalorder %s185, %s187
      %p194 = scmp.eq.s32.totalorder %s30, 1
      %p195 = por %p193, %p194
      %p196 = scmp.ne.s32.totalorder %s187, %s188
      %p197 = scmp.eq.s32.totalorder %s30, 0
      %p198 = por %p196, %p197
      %p199 = scmp.ne.s32.totalorder %s187, %s188
      %p200 = scmp.eq.s32.totalorder %s31, 1
      %p201 = por %p199, %p200
      %p203 = scmp.ne.s32.totalorder %s188, %s202
      %p204 = scmp.eq.s32.totalorder %s31, 0
      %p205 = por %p203, %p204
      %s207 = sadd.s32 %s206, 1
      %p210 = scmp.eq.s32.totalorder %s25, 1
      %p211 = scmp.ne.s32.totalorder %s206, %s208
      %p212 = scmp.eq.s32.totalorder %s25, 0
      %p213 = por %p211, %p212
      %p214 = scmp.ne.s32.totalorder %s206, %s208
      %p215 = scmp.eq.s32.totalorder %s30, 1
      %p216 = por %p214, %p215
      %p217 = scmp.ne.s32.totalorder %s208, %s209
      %p218 = scmp.eq.s32.totalorder %s30, 0
      %p219 = por %p217, %p218
      %p220 = scmp.ne.s32.totalorder %s208, %s209
      %p221 = scmp.eq.s32.totalorder %s31, 1
      %p222 = por %p220, %p221
      %p224 = scmp.ne.s32.totalorder %s209, %s223
      %p225 = scmp.eq.s32.totalorder %s31, 0
      %p226 = por %p224, %p225
      %s228 = sadd.s32 %s227, 1
      %p231 = scmp.eq.s32.totalorder %s25, 1
      %p232 = scmp.ne.s32.totalorder %s227, %s229
      %p233 = scmp.eq.s32.totalorder %s25, 0
      %p234 = por %p232, %p233
      %p235 = scmp.ne.s32.totalorder %s227, %s229
      %p236 = scmp.eq.s32.totalorder %s30, 1
      %p237 = por %p235, %p236
      %p238 = scmp.ne.s32.totalorder %s229, %s230
      %p239 = scmp.eq.s32.totalorder %s30, 0
      %p240 = por %p238, %p239
      %p241 = scmp.ne.s32.totalorder %s229, %s230
      %p242 = scmp.eq.s32.totalorder %s31, 1
      %p243 = por %p241, %p242
      %p245 = scmp.ne.s32.totalorder %s230, %s244
      %p246 = scmp.eq.s32.totalorder %s31, 0
      %p247 = por %p245, %p246
      %s249 = sadd.s32 %s248, 1
      %p252 = scmp.eq.s32.totalorder %s25, 1
      %p253 = scmp.ne.s32.totalorder %s248, %s250
      %p254 = scmp.eq.s32.totalorder %s25, 0
      %p255 = por %p253, %p254
      %p256 = scmp.ne.s32.totalorder %s248, %s250
      %p257 = scmp.eq.s32.totalorder %s30, 1
      %p258 = por %p256, %p257
      %p259 = scmp.ne.s32.totalorder %s250, %s251
      %p260 = scmp.eq.s32.totalorder %s30, 0
      %p261 = por %p259, %p260
      %p262 = scmp.ne.s32.totalorder %s250, %s251
      %p263 = scmp.eq.s32.totalorder %s31, 1
      %p264 = por %p262, %p263
      %p266 = scmp.ne.s32.totalorder %s251, %s265
      %p267 = scmp.eq.s32.totalorder %s31, 0
      %p268 = por %p266, %p267
      %s270 = sadd.s32 %s269, 1
      %p273 = scmp.eq.s32.totalorder %s25, 1
      %p274 = scmp.ne.s32.totalorder %s269, %s271
      %p275 = scmp.eq.s32.totalorder %s25, 0
      %p276 = por %p274, %p275
      %p277 = scmp.ne.s32.totalorder %s269, %s271
      %p278 = scmp.eq.s32.totalorder %s30, 1
      %p279 = por %p277, %p278
      %p280 = scmp.ne.s32.totalorder %s271, %s272
      %p281 = scmp.eq.s32.totalorder %s30, 0
      %p282 = por %p280, %p281
      %p283 = scmp.ne.s32.totalorder %s271, %s272
      %p284 = scmp.eq.s32.totalorder %s31, 1
      %p285 = por %p283, %p284
      %p287 = scmp.ne.s32.totalorder %s272, %s286
      %p288 = scmp.eq.s32.totalorder %s31, 0
      %p289 = por %p287, %p288
      %s291 = sadd.s32 %s290, 1
      %p294 = scmp.eq.s32.totalorder %s25, 1
      %p295 = scmp.ne.s32.totalorder %s290, %s292
      %p296 = scmp.eq.s32.totalorder %s25, 0
      %p297 = por %p295, %p296
      %p298 = scmp.ne.s32.totalorder %s290, %s292
      %p299 = scmp.eq.s32.totalorder %s30, 1
      %p300 = por %p298, %p299
      %p301 = scmp.ne.s32.totalorder %s292, %s293
      %p302 = scmp.eq.s32.totalorder %s30, 0
      %p303 = por %p301, %p302
      %p304 = scmp.ne.s32.totalorder %s292, %s293
      %p305 = scmp.eq.s32.totalorder %s31, 1
      %p306 = por %p304, %p305
      %p308 = scmp.ne.s32.totalorder %s293, %s307
      %p309 = scmp.eq.s32.totalorder %s31, 0
      %p310 = por %p308, %p309
      %s311 = ssub.s32 %s25, %s32
      %p312 = scmp.eq.s32.totalorder %s311, 0
      %s314 = sadd.s32 %s313, 1
      %s315 = scalar_select %p312, %s313, %s314
      %p318 = pneg %p312
      %p319 = scmp.eq.s32.totalorder %s25, 1
      %p320 = por %p318, %p319
      %p321 = scmp.ne.s32.totalorder %s313, %s316
      %p322 = scmp.eq.s32.totalorder %s25, 0
      %p323 = por %p321, %p322
      %p324 = scmp.ne.s32.totalorder %s313, %s316
      %p325 = scmp.eq.s32.totalorder %s30, 1
      %p326 = por %p324, %p325
      %p327 = scmp.ne.s32.totalorder %s316, %s317
      %p328 = scmp.eq.s32.totalorder %s30, 0
      %p329 = por %p327, %p328
      %p330 = scmp.ne.s32.totalorder %s316, %s317
      %p331 = scmp.eq.s32.totalorder %s31, 1
      %p332 = por %p330, %p331
      %p334 = scmp.ne.s32.totalorder %s317, %s333
      %p335 = scmp.eq.s32.totalorder %s31, 0
      %p336 = por %p334, %p335
      %p337 = scmp.le.s32.totalorder 1, %s25
      %p338 = scmp.lt.s32.totalorder %s25, 3
      %p339 = pnand %p337, %p338
      %p340 = pneg %p339
      // Predicated region
      $region9: #{tpu_custom_call.1} parent=5 // pred_check
        _
      $region10: #{tpu_custom_call.1} parent=5 // pred_check_branch
        %342 = sbr.rel (%p339) target = $region12
      $region11: #{tpu_custom_call.1} parent=5 // pred_region
        %s343 = ssub.s32 %s25, 1
        // Predicated region
        $region13: #{tpu_custom_call.1} parent=11 // pred_check
          %p344 = pneg %p72
        $region14: #{tpu_custom_call.1} parent=11 // pred_check_branch
          %346 = sbr.rel (%p344) target = $region16
        $region15: #{tpu_custom_call.1} parent=11 // pred_region
          _
        $region16: #{tpu_custom_call.1} parent=11 // pred_fallthru
          _
        // Predicated region
        $region17: #{tpu_custom_call.1} parent=11 // pred_check
          %p347 = pneg %p93
        $region18: #{tpu_custom_call.1} parent=11 // pred_check_branch
          %349 = sbr.rel (%p347) target = $region20
        $region19: #{tpu_custom_call.1} parent=11 // pred_region
          _
        $region20: #{tpu_custom_call.1} parent=11 // pred_fallthru
          _
        // Predicated region
        $region21: #{tpu_custom_call.1} parent=11 // pred_check
          %p350 = pneg %p114
        $region22: #{tpu_custom_call.1} parent=11 // pred_check_branch
          %352 = sbr.rel (%p350) target = $region24
        $region23: #{tpu_custom_call.1} parent=11 // pred_region
          _
        $region24: #{tpu_custom_call.1} parent=11 // pred_fallthru
          _
        // Predicated region
        $region25: #{tpu_custom_call.1} parent=11 // pred_check
          %p353 = pneg %p135
        $region26: #{tpu_custom_call.1} parent=11 // pred_check_branch
          %355 = sbr.rel (%p353) target = $region28
        $region27: #{tpu_custom_call.1} parent=11 // pred_region
          _
        $region28: #{tpu_custom_call.1} parent=11 // pred_fallthru
          _
        // Predicated region
        $region29: #{tpu_custom_call.1} parent=11 // pred_check
          %p356 = pneg %p156
        $region30: #{tpu_custom_call.1} parent=11 // pred_check_branch
          %358 = sbr.rel (%p356) target = $region32
        $region31: #{tpu_custom_call.1} parent=11 // pred_region
          _
        $region32: #{tpu_custom_call.1} parent=11 // pred_fallthru
          _
        // Predicated region
        $region33: #{tpu_custom_call.1} parent=11 // pred_check
          %p359 = pneg %p177
        $region34: #{tpu_custom_call.1} parent=11 // pred_check_branch
          %361 = sbr.rel (%p359) target = $region36
        $region35: #{tpu_custom_call.1} parent=11 // pred_region
          _
        $region36: #{tpu_custom_call.1} parent=11 // pred_fallthru
          _
        // Predicated region
        $region37: #{tpu_custom_call.1} parent=11 // pred_check
          %p362 = pneg %p198
        $region38: #{tpu_custom_call.1} parent=11 // pred_check_branch
          %364 = sbr.rel (%p362) target = $region40
        $region39: #{tpu_custom_call.1} parent=11 // pred_region
          _
        $region40: #{tpu_custom_call.1} parent=11 // pred_fallthru
          _
        // Predicated region
        $region41: #{tpu_custom_call.1} parent=11 // pred_check
          %p365 = pneg %p219
        $region42: #{tpu_custom_call.1} parent=11 // pred_check_branch
          %367 = sbr.rel (%p365) target = $region44
        $region43: #{tpu_custom_call.1} parent=11 // pred_region
          _
        $region44: #{tpu_custom_call.1} parent=11 // pred_fallthru
          _
        // Predicated region
        $region45: #{tpu_custom_call.1} parent=11 // pred_check
          %p368 = pneg %p240
        $region46: #{tpu_custom_call.1} parent=11 // pred_check_branch
          %370 = sbr.rel (%p368) target = $region48
        $region47: #{tpu_custom_call.1} parent=11 // pred_region
          _
        $region48: #{tpu_custom_call.1} parent=11 // pred_fallthru
          _
        // Predicated region
        $region49: #{tpu_custom_call.1} parent=11 // pred_check
          %p371 = pneg %p261
        $region50: #{tpu_custom_call.1} parent=11 // pred_check_branch
          %373 = sbr.rel (%p371) target = $region52
        $region51: #{tpu_custom_call.1} parent=11 // pred_region
          _
        $region52: #{tpu_custom_call.1} parent=11 // pred_fallthru
          _
        // Predicated region
        $region53: #{tpu_custom_call.1} parent=11 // pred_check
          %p374 = pneg %p282
        $region54: #{tpu_custom_call.1} parent=11 // pred_check_branch
          %376 = sbr.rel (%p374) target = $region56
        $region55: #{tpu_custom_call.1} parent=11 // pred_region
          _
        $region56: #{tpu_custom_call.1} parent=11 // pred_fallthru
          _
        // Predicated region
        $region57: #{tpu_custom_call.1} parent=11 // pred_check
          %p377 = pneg %p303
        $region58: #{tpu_custom_call.1} parent=11 // pred_check_branch
          %379 = sbr.rel (%p377) target = $region60
        $region59: #{tpu_custom_call.1} parent=11 // pred_region
          _
        $region60: #{tpu_custom_call.1} parent=11 // pred_fallthru
          _
      $region12: #{tpu_custom_call.1} parent=5 // pred_fallthru
        _
      %p380 = scmp.lt.s32.totalorder %s25, 2
      // Predicated region
      $region61: #{tpu_custom_call.1} parent=5 // pred_check
        %p381 = pneg %p380
      $region62: #{tpu_custom_call.1} parent=5 // pred_check_branch
        %383 = sbr.rel (%p381) target = $region64
      $region63: #{tpu_custom_call.1} parent=5 // pred_region
        // Predicated region
        $region65: #{tpu_custom_call.1} parent=63 // pred_check
          %p384 = pneg %p45
        $region66: #{tpu_custom_call.1} parent=63 // pred_check_branch
          %386 = sbr.rel (%p384) target = $region68
        $region67: #{tpu_custom_call.1} parent=63 // pred_region
          %s387 = sand.u32 %s35, 1
          %s388 = scalar_lea.sflag [#allocation3], %s387
          %s389 = sand.u32 %s35, 1
          %s390 = smul.addr %s389, 32
          %s391 = scalar_lea.vmem [#allocation2], %s390
          %s392 = smul.u32 4, %s25
          %s394 = ssub.s32 512, 512
          %395 = vsyncadd %s388, %s394
          %s396 = smul.addr %s392, 128
          %s397 = scalar_lea.hbm %s0, %s396
          %s398 = sshll.u32 %s391, 4
          %s399 = int_to_ptr.vmem [resolvable:$true] %s398
          %404 = dma.hbm_to_vmem [thread:$0]  %s397, 512, %s399, %s388, 128, 128, 8
        $region68: #{tpu_custom_call.1} parent=63 // pred_fallthru
          _
      $region64: #{tpu_custom_call.1} parent=5 // pred_fallthru
        _
      %p405 = scmp.le.s32.totalorder 1, %s25
      %p406 = scmp.lt.s32.totalorder %s25, 3
      %p407 = pnand %p405, %p406
      %p408 = pneg %p407
      // Predicated region
      $region69: #{tpu_custom_call.1} parent=5 // pred_check
        _
      $region70: #{tpu_custom_call.1} parent=5 // pred_check_branch
        %410 = sbr.rel (%p407) target = $region72
      $region71: #{tpu_custom_call.1} parent=5 // pred_region
        %s411 = ssub.s32 %s25, 1
        %s412 = sand.u32 %s38, 1
        %s413 = scalar_lea.sflag [#allocation3], %s412
        %s414 = sand.u32 %s38, 1
        %s415 = smul.addr %s414, 32
        %s416 = scalar_lea.vmem [#allocation2], %s415
        // Predicated region
        $region73: #{tpu_custom_call.1} parent=71 // pred_check
          %p417 = pneg %p51
        $region74: #{tpu_custom_call.1} parent=71 // pred_check_branch
          %419 = sbr.rel (%p417) target = $region76
        $region75: #{tpu_custom_call.1} parent=71 // pred_region
          %420 = dma.done %s413, 512
        $region76: #{tpu_custom_call.1} parent=71 // pred_fallthru
          _
        %s421 = sand.u32 %s38, 1
        %s422 = scalar_lea.sflag [#allocation3], %s421
        %s423 = sand.u32 %s38, 1
        %s424 = smul.addr %s423, 32
        %s425 = scalar_lea.vmem [#allocation2], %s424
        %p426 = pneg %p51
        %p427 = pneg %p48
        %p428 = pneg %p72
        %p429 = pneg %p69
        %p430 = pneg %p93
        %p431 = pneg %p90
        %p432 = pneg %p114
        %p433 = pneg %p111
        %p434 = pneg %p135
        %p435 = pneg %p132
        %p436 = pneg %p156
        %p437 = pneg %p153
        %p438 = pneg %p177
        %p439 = pneg %p174
        %p440 = pneg %p198
        %p441 = pneg %p195
        %p442 = pneg %p219
        %p443 = pneg %p216
        %p444 = pneg %p240
        %p445 = pneg %p237
        %p446 = pneg %p261
        %p447 = pneg %p258
        %p448 = pneg %p282
        %p449 = pneg %p279
        %p450 = pneg %p303
        %p451 = pneg %p300
        %p452 = pneg %p329
        %p453 = pneg %p326
        %s454 = sand.u32 %s316, 1
        %s455 = scalar_lea.sflag [#allocation4], %s454
        %s456 = sand.u32 %s316, 1
        %s457 = smul.addr %s456, 32
        %s458 = scalar_lea.vmem [#allocation5], %s457
        %s459 = smul.u32 4, %s30
        %s460 = smul.u32 4, %s30
        %v461 = vld [vmem:[%s416] sm:$0xff]
        %v462 = vld [vmem:[%s416 + $0x8] sm:$0xff]
        %v463 = vld [vmem:[%s416 + $0x10] sm:$0xff]
        %v464 = vld [vmem:[%s416 + $0x18] sm:$0xff]
        %v465 = vld [vmem:[%s1] sm:$0x1]
        %v466 = vld [vmem:[%s2] sm:$0x1]
        %vm467 = vcmask 261120
        %v468 = vsel %vm467, %v461, 0.0
        %469 = vadd.xlane.f32.xlu0 %v468
        %v470 = vpop.xlane.xlu0 %469
        %v471 = vsel %vm467, %v462, 0.0
        %472 = vadd.xlane.f32.xlu0 %v471
        %v473 = vpop.xlane.xlu0 %472
        %v474 = vsel %vm467, %v463, 0.0
        %475 = vadd.xlane.f32.xlu0 %v474
        %v476 = vpop.xlane.xlu0 %475
        %v477 = vsel %vm467, %v464, 0.0
        %478 = vadd.xlane.f32.xlu0 %v477
        %v479 = vpop.xlane.xlu0 %478
        %v480 = vrcp.pop 32.0
        %v481 = vmul.f32 %v470, %v480
        %v482 = vmul.f32 %v473, %v480
        %v483 = vmul.f32 %v476, %v480
        %v484 = vmul.f32 %v479, %v480
        %v485 = vsub.f32 %v461, %v481
        %v486 = vsub.f32 %v462, %v482
        %v487 = vsub.f32 %v463, %v483
        %v488 = vsub.f32 %v464, %v484
        %v489 = vmul.f32 %v485, %v485
        %v490 = vmul.f32 %v486, %v486
        %v491 = vmul.f32 %v487, %v487
        %v492 = vmul.f32 %v488, %v488
        %v493 = vsel %vm467, %v489, 0.0
        %494 = vadd.xlane.f32.xlu0 %v493
        %v495 = vpop.xlane.xlu0 %494
        %v496 = vsel %vm467, %v490, 0.0
        %497 = vadd.xlane.f32.xlu0 %v496
        %v498 = vpop.xlane.xlu0 %497
        %v499 = vsel %vm467, %v491, 0.0
        %500 = vadd.xlane.f32.xlu0 %v499
        %v501 = vpop.xlane.xlu0 %500
        %v502 = vsel %vm467, %v492, 0.0
        %503 = vadd.xlane.f32.xlu0 %v502
        %v504 = vpop.xlane.xlu0 %503
        %v505 = vmul.f32 %v495, %v480
        %v506 = vmul.f32 %v498, %v480
        %v507 = vmul.f32 %v501, %v480
        %v508 = vmul.f32 %v504, %v480
        %v509 = vadd.f32 %v505, 1e-05
        %v510 = vadd.f32 %v506, 1e-05
        %v511 = vadd.f32 %v507, 1e-05
        %v512 = vadd.f32 %v508, 1e-05
        %v513 = vrsqrt.pop %v509
        %v514 = vrsqrt.pop %v510
        %v515 = vrsqrt.pop %v511
        %v516 = vrsqrt.pop %v512
        %v517 = vmul.f32 %v485, %v513
        %v518 = vmul.f32 %v486, %v514
        %v519 = vmul.f32 %v487, %v515
        %v520 = vmul.f32 %v488, %v516
        %v522 = vlaneseq
        %v523 = vshrl.u32 %v522, 7
        %v524 = vsub.s32 0, %v523
        %v525 = vrot.slane %v465, %v524
        %v527 = vmul.f32 %v517, %v525
        %v528 = vmul.f32 %v518, %v525
        %v529 = vmul.f32 %v519, %v525
        %v530 = vmul.f32 %v520, %v525
        %v532 = vlaneseq
        %v533 = vshrl.u32 %v532, 7
        %v534 = vsub.s32 0, %v533
        %v535 = vrot.slane %v466, %v534
        %v537 = vadd.f32 %v527, %v535
        %v538 = vadd.f32 %v528, %v535
        %v539 = vadd.f32 %v529, %v535
        %v540 = vadd.f32 %v530, %v535
        %v541 = vld [vmem:[%s3] sm:$0xff]
        %v542 = vld [vmem:[%s3 + $0x8] sm:$0xff]
        %v543 = vld [vmem:[%s4] sm:$0xff]
        %v544 = vld [vmem:[%s4 + $0x8] sm:$0xff]
        %546 = vset.pattern.permute.xlu0 0
        %547 = vperm.xlu0 %546, %v543
        %v548 = vpop.permute.xlu0 %547
        %551 = vset.pattern.permute.xlu0 0
        %552 = vperm.xlu0 %551, %v544
        %v553 = vpop.permute.xlu0 %552
        %vm555 = vcmask 64512
        %v557 = vsel %vm555, %v541, 0
        %v560 = vsel %vm555, %v542, 0
        %562 = vmatprep.subr.mxu0 0.0
        %563 = vmatpush1.msra.mxu0 0.0
        %564 = vmatprep.subr.mxu0 0.0
        %565 = vmatpush1.msra.mxu0 0.0
        %566 = vmatprep.subr.mxu0 0.0
        %567 = vmatpush1.msra.mxu0 0.0
        %568 = vmatprep.subr.mxu0 0.0
        %569 = vmatpush1.msra.mxu0 0.0
        %570 = vmatprep.subr.mxu0 0.0
        %571 = vmatpush1.msra.mxu0 0.0
        %572 = vmatprep.subr.mxu0 0.0
        %573 = vmatpush1.msra.mxu0 0.0
        %574 = vmatprep.subr.mxu0 0.0
        %575 = vmatpush1.msra.mxu0 0.0
        %576 = vmatprep.subr.mxu0 0.0
        %577 = vmatpush1.msra.mxu0 0.0
        %578 = vmatprep.subr.mxu0 0.0
        %579 = vmatpush1.msra.mxu0 0.0
        %580 = vmatprep.subr.mxu0 0.0
        %581 = vmatpush1.msra.mxu0 0.0
        %582 = vmatprep.subr.mxu0 0.0
        %583 = vmatpush1.msra.mxu0 0.0
        %584 = vmatprep.subr.mxu0 0.0
        %585 = vmatpush1.msra.mxu0 0.0
        %586 = vmatprep.subr.mxu0 0.0
        %587 = vmatpush1.msra.mxu0 0.0
        %588 = vmatprep.subr.mxu0 0.0
        %589 = vmatpush1.msra.mxu0 0.0
        %590 = vmatprep.subr.mxu0 0.0
        %591 = vmatpush1.msra.mxu0 0.0
        %592 = vmatprep.subr.mxu0 0.0
        %593 = vmatpush1.msra.mxu0 %v537
        %594 = vmatprep.subr.mxu0 0.0
        %595 = vmatpush2.msra.mxu0 0.0
        %596 = vmatprep.subr.mxu0 0.0
        %597 = vmatpush2.msra.mxu0 0.0
        %598 = vmatprep.subr.mxu0 0.0
        %599 = vmatpush2.msra.mxu0 0.0
        %600 = vmatprep.subr.mxu0 0.0
        %601 = vmatpush2.msra.mxu0 0.0
        %602 = vmatprep.subr.mxu0 0.0
        %603 = vmatpush2.msra.mxu0 0.0
        %604 = vmatprep.subr.mxu0 0.0
        %605 = vmatpush2.msra.mxu0 0.0
        %606 = vmatprep.subr.mxu0 0.0
        %607 = vmatpush2.msra.mxu0 0.0
        %608 = vmatprep.subr.mxu0 0.0
        %609 = vmatpush2.msra.mxu0 0.0
        %610 = vmatprep.subr.mxu0 0.0
        %611 = vmatpush2.msra.mxu0 0.0
        %612 = vmatprep.subr.mxu0 0.0
        %613 = vmatpush2.msra.mxu0 0.0
        %614 = vmatprep.subr.mxu0 0.0
        %615 = vmatpush2.msra.mxu0 0.0
        %616 = vmatprep.subr.mxu0 0.0
        %617 = vmatpush2.msra.mxu0 0.0
        %618 = vmatprep.subr.mxu0 0.0
        %619 = vmatpush2.msra.mxu0 0.0
        %620 = vmatprep.subr.mxu0 0.0
        %621 = vmatpush2.msra.mxu0 0.0
        %622 = vmatprep.subr.mxu0 0.0
        %623 = vmatpush2.msra.mxu0 0.0
        %624 = vmatprep.subr.mxu0 0.0
        %625 = vmatpush2.msra.mxu0 0.0
        %626 = vmatprep.mubr.f32.mxu0 0.0
        %627 = vmatmul.mubr.f32.gmra.mxu0 %v557
        %v628 = vpop.f32.mrf.mxu0
        %v629 = vadd.f32 %v548, %v628
        %v630 = vpop.f32.mrf.mxu0
        %631 = vmatprep.mubr.f32.mxu0 0.0
        %632 = vmatmul.mubr.f32.gmra.mxu0 %v560
        %v633 = vpop.f32.mrf.mxu0
        %v634 = vadd.f32 %v553, %v633
        %v635 = vpop.f32.mrf.mxu0
        %636 = vdwg.mxu0
        %637 = vmatprep.subr.mxu0 0.0
        %638 = vmatpush1.msra.mxu0 0.0
        %639 = vmatprep.subr.mxu0 0.0
        %640 = vmatpush1.msra.mxu0 0.0
        %641 = vmatprep.subr.mxu0 0.0
        %642 = vmatpush1.msra.mxu0 0.0
        %643 = vmatprep.subr.mxu0 0.0
        %644 = vmatpush1.msra.mxu0 0.0
        %645 = vmatprep.subr.mxu0 0.0
        %646 = vmatpush1.msra.mxu0 0.0
        %647 = vmatprep.subr.mxu0 0.0
        %648 = vmatpush1.msra.mxu0 0.0
        %649 = vmatprep.subr.mxu0 0.0
        %650 = vmatpush1.msra.mxu0 0.0
        %651 = vmatprep.subr.mxu0 0.0
        %652 = vmatpush1.msra.mxu0 0.0
        %653 = vmatprep.subr.mxu0 0.0
        %654 = vmatpush1.msra.mxu0 0.0
        %655 = vmatprep.subr.mxu0 0.0
        %656 = vmatpush1.msra.mxu0 0.0
        %657 = vmatprep.subr.mxu0 0.0
        %658 = vmatpush1.msra.mxu0 0.0
        %659 = vmatprep.subr.mxu0 0.0
        %660 = vmatpush1.msra.mxu0 0.0
        %661 = vmatprep.subr.mxu0 0.0
        %662 = vmatpush1.msra.mxu0 0.0
        %663 = vmatprep.subr.mxu0 0.0
        %664 = vmatpush1.msra.mxu0 0.0
        %665 = vmatprep.subr.mxu0 0.0
        %666 = vmatpush1.msra.mxu0 0.0
        %667 = vmatprep.subr.mxu0 0.0
        %668 = vmatpush1.msra.mxu0 %v538
        %669 = vmatprep.subr.mxu0 0.0
        %670 = vmatpush2.msra.mxu0 0.0
        %671 = vmatprep.subr.mxu0 0.0
        %672 = vmatpush2.msra.mxu0 0.0
        %673 = vmatprep.subr.mxu0 0.0
        %674 = vmatpush2.msra.mxu0 0.0
        %675 = vmatprep.subr.mxu0 0.0
        %676 = vmatpush2.msra.mxu0 0.0
        %677 = vmatprep.subr.mxu0 0.0
        %678 = vmatpush2.msra.mxu0 0.0
        %679 = vmatprep.subr.mxu0 0.0
        %680 = vmatpush2.msra.mxu0 0.0
        %681 = vmatprep.subr.mxu0 0.0
        %682 = vmatpush2.msra.mxu0 0.0
        %683 = vmatprep.subr.mxu0 0.0
        %684 = vmatpush2.msra.mxu0 0.0
        %685 = vmatprep.subr.mxu0 0.0
        %686 = vmatpush2.msra.mxu0 0.0
        %687 = vmatprep.subr.mxu0 0.0
        %688 = vmatpush2.msra.mxu0 0.0
        %689 = vmatprep.subr.mxu0 0.0
        %690 = vmatpush2.msra.mxu0 0.0
        %691 = vmatprep.subr.mxu0 0.0
        %692 = vmatpush2.msra.mxu0 0.0
        %693 = vmatprep.subr.mxu0 0.0
        %694 = vmatpush2.msra.mxu0 0.0
        %695 = vmatprep.subr.mxu0 0.0
        %696 = vmatpush2.msra.mxu0 0.0
        %697 = vmatprep.subr.mxu0 0.0
        %698 = vmatpush2.msra.mxu0 0.0
        %699 = vmatprep.subr.mxu0 0.0
        %700 = vmatpush2.msra.mxu0 0.0
        %701 = vmatprep.mubr.f32.mxu0 0.0
        %702 = vmatmul.mubr.f32.gmra.mxu0 %v557
        %v703 = vpop.f32.mrf.mxu0
        %v704 = vadd.f32 %v548, %v703
        %v705 = vpop.f32.mrf.mxu0
        %706 = vmatprep.mubr.f32.mxu0 0.0
        %707 = vmatmul.mubr.f32.gmra.mxu0 %v560
        %v708 = vpop.f32.mrf.mxu0
        %v709 = vadd.f32 %v553, %v708
        %v710 = vpop.f32.mrf.mxu0
        %711 = vdwg.mxu0
        %712 = vmatprep.subr.mxu0 0.0
        %713 = vmatpush1.msra.mxu0 0.0
        %714 = vmatprep.subr.mxu0 0.0
        %715 = vmatpush1.msra.mxu0 0.0
        %716 = vmatprep.subr.mxu0 0.0
        %717 = vmatpush1.msra.mxu0 0.0
        %718 = vmatprep.subr.mxu0 0.0
        %719 = vmatpush1.msra.mxu0 0.0
        %720 = vmatprep.subr.mxu0 0.0
        %721 = vmatpush1.msra.mxu0 0.0
        %722 = vmatprep.subr.mxu0 0.0
        %723 = vmatpush1.msra.mxu0 0.0
        %724 = vmatprep.subr.mxu0 0.0
        %725 = vmatpush1.msra.mxu0 0.0
        %726 = vmatprep.subr.mxu0 0.0
        %727 = vmatpush1.msra.mxu0 0.0
        %728 = vmatprep.subr.mxu0 0.0
        %729 = vmatpush1.msra.mxu0 0.0
        %730 = vmatprep.subr.mxu0 0.0
        %731 = vmatpush1.msra.mxu0 0.0
        %732 = vmatprep.subr.mxu0 0.0
        %733 = vmatpush1.msra.mxu0 0.0
        %734 = vmatprep.subr.mxu0 0.0
        %735 = vmatpush1.msra.mxu0 0.0
        %736 = vmatprep.subr.mxu0 0.0
        %737 = vmatpush1.msra.mxu0 0.0
        %738 = vmatprep.subr.mxu0 0.0
        %739 = vmatpush1.msra.mxu0 0.0
        %740 = vmatprep.subr.mxu0 0.0
        %741 = vmatpush1.msra.mxu0 0.0
        %742 = vmatprep.subr.mxu0 0.0
        %743 = vmatpush1.msra.mxu0 %v539
        %744 = vmatprep.subr.mxu0 0.0
        %745 = vmatpush2.msra.mxu0 0.0
        %746 = vmatprep.subr.mxu0 0.0
        %747 = vmatpush2.msra.mxu0 0.0
        %748 = vmatprep.subr.mxu0 0.0
        %749 = vmatpush2.msra.mxu0 0.0
        %750 = vmatprep.subr.mxu0 0.0
        %751 = vmatpush2.msra.mxu0 0.0
        %752 = vmatprep.subr.mxu0 0.0
        %753 = vmatpush2.msra.mxu0 0.0
        %754 = vmatprep.subr.mxu0 0.0
        %755 = vmatpush2.msra.mxu0 0.0
        %756 = vmatprep.subr.mxu0 0.0
        %757 = vmatpush2.msra.mxu0 0.0
        %758 = vmatprep.subr.mxu0 0.0
        %759 = vmatpush2.msra.mxu0 0.0
        %760 = vmatprep.subr.mxu0 0.0
        %761 = vmatpush2.msra.mxu0 0.0
        %762 = vmatprep.subr.mxu0 0.0
        %763 = vmatpush2.msra.mxu0 0.0
        %764 = vmatprep.subr.mxu0 0.0
        %765 = vmatpush2.msra.mxu0 0.0
        %766 = vmatprep.subr.mxu0 0.0
        %767 = vmatpush2.msra.mxu0 0.0
        %768 = vmatprep.subr.mxu0 0.0
        %769 = vmatpush2.msra.mxu0 0.0
        %770 = vmatprep.subr.mxu0 0.0
        %771 = vmatpush2.msra.mxu0 0.0
        %772 = vmatprep.subr.mxu0 0.0
        %773 = vmatpush2.msra.mxu0 0.0
        %774 = vmatprep.subr.mxu0 0.0
        %775 = vmatpush2.msra.mxu0 0.0
        %776 = vmatprep.mubr.f32.mxu0 0.0
        %777 = vmatmul.mubr.f32.gmra.mxu0 %v557
        %v778 = vpop.f32.mrf.mxu0
        %v779 = vadd.f32 %v548, %v778
        %v780 = vpop.f32.mrf.mxu0
        %781 = vmatprep.mubr.f32.mxu0 0.0
        %782 = vmatmul.mubr.f32.gmra.mxu0 %v560
        %v783 = vpop.f32.mrf.mxu0
        %v784 = vadd.f32 %v553, %v783
        %v785 = vpop.f32.mrf.mxu0
        %786 = vdwg.mxu0
        %787 = vmatprep.subr.mxu0 0.0
        %788 = vmatpush1.msra.mxu0 0.0
        %789 = vmatprep.subr.mxu0 0.0
        %790 = vmatpush1.msra.mxu0 0.0
        %791 = vmatprep.subr.mxu0 0.0
        %792 = vmatpush1.msra.mxu0 0.0
        %793 = vmatprep.subr.mxu0 0.0
        %794 = vmatpush1.msra.mxu0 0.0
        %795 = vmatprep.subr.mxu0 0.0
        %796 = vmatpush1.msra.mxu0 0.0
        %797 = vmatprep.subr.mxu0 0.0
        %798 = vmatpush1.msra.mxu0 0.0
        %799 = vmatprep.subr.mxu0 0.0
        %800 = vmatpush1.msra.mxu0 0.0
        %801 = vmatprep.subr.mxu0 0.0
        %802 = vmatpush1.msra.mxu0 0.0
        %803 = vmatprep.subr.mxu0 0.0
        %804 = vmatpush1.msra.mxu0 0.0
        %805 = vmatprep.subr.mxu0 0.0
        %806 = vmatpush1.msra.mxu0 0.0
        %807 = vmatprep.subr.mxu0 0.0
        %808 = vmatpush1.msra.mxu0 0.0
        %809 = vmatprep.subr.mxu0 0.0
        %810 = vmatpush1.msra.mxu0 0.0
        %811 = vmatprep.subr.mxu0 0.0
        %812 = vmatpush1.msra.mxu0 0.0
        %813 = vmatprep.subr.mxu0 0.0
        %814 = vmatpush1.msra.mxu0 0.0
        %815 = vmatprep.subr.mxu0 0.0
        %816 = vmatpush1.msra.mxu0 0.0
        %817 = vmatprep.subr.mxu0 0.0
        %818 = vmatpush1.msra.mxu0 %v540
        %819 = vmatprep.subr.mxu0 0.0
        %820 = vmatpush2.msra.mxu0 0.0
        %821 = vmatprep.subr.mxu0 0.0
        %822 = vmatpush2.msra.mxu0 0.0
        %823 = vmatprep.subr.mxu0 0.0
        %824 = vmatpush2.msra.mxu0 0.0
        %825 = vmatprep.subr.mxu0 0.0
        %826 = vmatpush2.msra.mxu0 0.0
        %827 = vmatprep.subr.mxu0 0.0
        %828 = vmatpush2.msra.mxu0 0.0
        %829 = vmatprep.subr.mxu0 0.0
        %830 = vmatpush2.msra.mxu0 0.0
        %831 = vmatprep.subr.mxu0 0.0
        %832 = vmatpush2.msra.mxu0 0.0
        %833 = vmatprep.subr.mxu0 0.0
        %834 = vmatpush2.msra.mxu0 0.0
        %835 = vmatprep.subr.mxu0 0.0
        %836 = vmatpush2.msra.mxu0 0.0
        %837 = vmatprep.subr.mxu0 0.0
        %838 = vmatpush2.msra.mxu0 0.0
        %839 = vmatprep.subr.mxu0 0.0
        %840 = vmatpush2.msra.mxu0 0.0
        %841 = vmatprep.subr.mxu0 0.0
        %842 = vmatpush2.msra.mxu0 0.0
        %843 = vmatprep.subr.mxu0 0.0
        %844 = vmatpush2.msra.mxu0 0.0
        %845 = vmatprep.subr.mxu0 0.0
        %846 = vmatpush2.msra.mxu0 0.0
        %847 = vmatprep.subr.mxu0 0.0
        %848 = vmatpush2.msra.mxu0 0.0
        %849 = vmatprep.subr.mxu0 0.0
        %850 = vmatpush2.msra.mxu0 0.0
        %851 = vmatprep.mubr.f32.mxu0 0.0
        %852 = vmatmul.mubr.f32.gmra.mxu0 %v557
        %v853 = vpop.f32.mrf.mxu0
        %v854 = vadd.f32 %v548, %v853
        %v855 = vpop.f32.mrf.mxu0
        %856 = vmatprep.mubr.f32.mxu0 0.0
        %857 = vmatmul.mubr.f32.gmra.mxu0 %v560
        %v858 = vpop.f32.mrf.mxu0
        %v859 = vadd.f32 %v553, %v858
        %v860 = vpop.f32.mrf.mxu0
        %861 = vdwg.mxu0
        %v862 = vmul.f32 %v629, 0.5
        %v863 = vmul.f32 %v634, 0.5
        %v864 = vmul.f32 %v704, 0.5
        %v865 = vmul.f32 %v709, 0.5
        %v866 = vmul.f32 %v779, 0.5
        %v867 = vmul.f32 %v784, 0.5
        %v868 = vmul.f32 %v854, 0.5
        %v869 = vmul.f32 %v859, 0.5
        %v870 = vmul.f32 %v629, 0.70710677
        %v871 = vmul.f32 %v634, 0.70710677
        %v872 = vmul.f32 %v704, 0.70710677
        %v873 = vmul.f32 %v709, 0.70710677
        %v874 = vmul.f32 %v779, 0.70710677
        %v875 = vmul.f32 %v784, 0.70710677
        %v876 = vmul.f32 %v854, 0.70710677
        %v877 = vmul.f32 %v859, 0.70710677
        %v878 = verf.f32.pop %v870
        %v879 = verf.f32.pop %v871
        %v880 = verf.f32.pop %v872
        %v881 = verf.f32.pop %v873
        %v882 = verf.f32.pop %v874
        %v883 = verf.f32.pop %v875
        %v884 = verf.f32.pop %v876
        %v885 = verf.f32.pop %v877
        %v886 = vadd.f32 %v878, 1.0
        %v887 = vadd.f32 %v879, 1.0
        %v888 = vadd.f32 %v880, 1.0
        %v889 = vadd.f32 %v881, 1.0
        %v890 = vadd.f32 %v882, 1.0
        %v891 = vadd.f32 %v883, 1.0
        %v892 = vadd.f32 %v884, 1.0
        %v893 = vadd.f32 %v885, 1.0
        %v894 = vmul.f32 %v862, %v886
        %v895 = vmul.f32 %v863, %v887
        %v896 = vmul.f32 %v864, %v888
        %v897 = vmul.f32 %v865, %v889
        %v898 = vmul.f32 %v866, %v890
        %v899 = vmul.f32 %v867, %v891
        %v900 = vmul.f32 %v868, %v892
        %v901 = vmul.f32 %v869, %v893
        %v902 = vld [vmem:[%s5] sm:$0xff]
        %v903 = vld [vmem:[%s6] sm:$0xff]
        %905 = vset.pattern.permute.xlu0 0
        %906 = vperm.xlu0 %905, %v903
        %v907 = vpop.permute.xlu0 %906
        %vm909 = vcmask 130048
        %v911 = vsel %vm909, %v902, 0
        %913 = vmatprep.subr.mxu0 0.0
        %914 = vmatpush1.msra.mxu0 0.0
        %915 = vmatprep.subr.mxu0 0.0
        %916 = vmatpush1.msra.mxu0 0.0
        %917 = vmatprep.subr.mxu0 0.0
        %918 = vmatpush1.msra.mxu0 0.0
        %919 = vmatprep.subr.mxu0 0.0
        %920 = vmatpush1.msra.mxu0 0.0
        %921 = vmatprep.subr.mxu0 0.0
        %922 = vmatpush1.msra.mxu0 0.0
        %923 = vmatprep.subr.mxu0 0.0
        %924 = vmatpush1.msra.mxu0 0.0
        %925 = vmatprep.subr.mxu0 0.0
        %926 = vmatpush1.msra.mxu0 0.0
        %927 = vmatprep.subr.mxu0 0.0
        %928 = vmatpush1.msra.mxu0 0.0
        %929 = vmatprep.subr.mxu0 0.0
        %930 = vmatpush1.msra.mxu0 0.0
        %931 = vmatprep.subr.mxu0 0.0
        %932 = vmatpush1.msra.mxu0 0.0
        %933 = vmatprep.subr.mxu0 0.0
        %934 = vmatpush1.msra.mxu0 0.0
        %935 = vmatprep.subr.mxu0 0.0
        %936 = vmatpush1.msra.mxu0 0.0
        %937 = vmatprep.subr.mxu0 0.0
        %938 = vmatpush1.msra.mxu0 0.0
        %939 = vmatprep.subr.mxu0 0.0
        %940 = vmatpush1.msra.mxu0 0.0
        %941 = vmatprep.subr.mxu0 0.0
        %942 = vmatpush1.msra.mxu0 %v895
        %943 = vmatprep.subr.mxu0 0.0
        %944 = vmatpush1.msra.mxu0 %v894
        %945 = vmatprep.subr.mxu0 0.0
        %946 = vmatpush2.msra.mxu0 0.0
        %947 = vmatprep.subr.mxu0 0.0
        %948 = vmatpush2.msra.mxu0 0.0
        %949 = vmatprep.subr.mxu0 0.0
        %950 = vmatpush2.msra.mxu0 0.0
        %951 = vmatprep.subr.mxu0 0.0
        %952 = vmatpush2.msra.mxu0 0.0
        %953 = vmatprep.subr.mxu0 0.0
        %954 = vmatpush2.msra.mxu0 0.0
        %955 = vmatprep.subr.mxu0 0.0
        %956 = vmatpush2.msra.mxu0 0.0
        %957 = vmatprep.subr.mxu0 0.0
        %958 = vmatpush2.msra.mxu0 0.0
        %959 = vmatprep.subr.mxu0 0.0
        %960 = vmatpush2.msra.mxu0 0.0
        %961 = vmatprep.subr.mxu0 0.0
        %962 = vmatpush2.msra.mxu0 0.0
        %963 = vmatprep.subr.mxu0 0.0
        %964 = vmatpush2.msra.mxu0 0.0
        %965 = vmatprep.subr.mxu0 0.0
        %966 = vmatpush2.msra.mxu0 0.0
        %967 = vmatprep.subr.mxu0 0.0
        %968 = vmatpush2.msra.mxu0 0.0
        %969 = vmatprep.subr.mxu0 0.0
        %970 = vmatpush2.msra.mxu0 0.0
        %971 = vmatprep.subr.mxu0 0.0
        %972 = vmatpush2.msra.mxu0 0.0
        %973 = vmatprep.subr.mxu0 0.0
        %974 = vmatpush2.msra.mxu0 0.0
        %975 = vmatprep.subr.mxu0 0.0
        %976 = vmatpush2.msra.mxu0 0.0
        %977 = vmatprep.mubr.f32.mxu0 0.0
        %978 = vmatmul.mubr.f32.gmra.mxu0 %v911
        %v979 = vpop.f32.mrf.mxu0
        %v980 = vadd.f32 %v907, %v979
        %v981 = vpop.f32.mrf.mxu0
        %982 = vdwg.mxu0
        %983 = vmatprep.subr.mxu0 0.0
        %984 = vmatpush1.msra.mxu0 0.0
        %985 = vmatprep.subr.mxu0 0.0
        %986 = vmatpush1.msra.mxu0 0.0
        %987 = vmatprep.subr.mxu0 0.0
        %988 = vmatpush1.msra.mxu0 0.0
        %989 = vmatprep.subr.mxu0 0.0
        %990 = vmatpush1.msra.mxu0 0.0
        %991 = vmatprep.subr.mxu0 0.0
        %992 = vmatpush1.msra.mxu0 0.0
        %993 = vmatprep.subr.mxu0 0.0
        %994 = vmatpush1.msra.mxu0 0.0
        %995 = vmatprep.subr.mxu0 0.0
        %996 = vmatpush1.msra.mxu0 0.0
        %997 = vmatprep.subr.mxu0 0.0
        %998 = vmatpush1.msra.mxu0 0.0
        %999 = vmatprep.subr.mxu0 0.0
        %1000 = vmatpush1.msra.mxu0 0.0
        %1001 = vmatprep.subr.mxu0 0.0
        %1002 = vmatpush1.msra.mxu0 0.0
        %1003 = vmatprep.subr.mxu0 0.0
        %1004 = vmatpush1.msra.mxu0 0.0
        %1005 = vmatprep.subr.mxu0 0.0
        %1006 = vmatpush1.msra.mxu0 0.0
        %1007 = vmatprep.subr.mxu0 0.0
        %1008 = vmatpush1.msra.mxu0 0.0
        %1009 = vmatprep.subr.mxu0 0.0
        %1010 = vmatpush1.msra.mxu0 0.0
        %1011 = vmatprep.subr.mxu0 0.0
        %1012 = vmatpush1.msra.mxu0 %v897
        %1013 = vmatprep.subr.mxu0 0.0
        %1014 = vmatpush1.msra.mxu0 %v896
        %1015 = vmatprep.subr.mxu0 0.0
        %1016 = vmatpush2.msra.mxu0 0.0
        %1017 = vmatprep.subr.mxu0 0.0
        %1018 = vmatpush2.msra.mxu0 0.0
        %1019 = vmatprep.subr.mxu0 0.0
        %1020 = vmatpush2.msra.mxu0 0.0
        %1021 = vmatprep.subr.mxu0 0.0
        %1022 = vmatpush2.msra.mxu0 0.0
        %1023 = vmatprep.subr.mxu0 0.0
        %1024 = vmatpush2.msra.mxu0 0.0
        %1025 = vmatprep.subr.mxu0 0.0
        %1026 = vmatpush2.msra.mxu0 0.0
        %1027 = vmatprep.subr.mxu0 0.0
        %1028 = vmatpush2.msra.mxu0 0.0
        %1029 = vmatprep.subr.mxu0 0.0
        %1030 = vmatpush2.msra.mxu0 0.0
        %1031 = vmatprep.subr.mxu0 0.0
        %1032 = vmatpush2.msra.mxu0 0.0
        %1033 = vmatprep.subr.mxu0 0.0
        %1034 = vmatpush2.msra.mxu0 0.0
        %1035 = vmatprep.subr.mxu0 0.0
        %1036 = vmatpush2.msra.mxu0 0.0
        %1037 = vmatprep.subr.mxu0 0.0
        %1038 = vmatpush2.msra.mxu0 0.0
        %1039 = vmatprep.subr.mxu0 0.0
        %1040 = vmatpush2.msra.mxu0 0.0
        %1041 = vmatprep.subr.mxu0 0.0
        %1042 = vmatpush2.msra.mxu0 0.0
        %1043 = vmatprep.subr.mxu0 0.0
        %1044 = vmatpush2.msra.mxu0 0.0
        %1045 = vmatprep.subr.mxu0 0.0
        %1046 = vmatpush2.msra.mxu0 0.0
        %1047 = vmatprep.mubr.f32.mxu0 0.0
        %1048 = vmatmul.mubr.f32.gmra.mxu0 %v911
        %v1049 = vpop.f32.mrf.mxu0
        %v1050 = vadd.f32 %v907, %v1049
        %v1051 = vpop.f32.mrf.mxu0
        %1052 = vdwg.mxu0
        %1053 = vmatprep.subr.mxu0 0.0
        %1054 = vmatpush1.msra.mxu0 0.0
        %1055 = vmatprep.subr.mxu0 0.0
        %1056 = vmatpush1.msra.mxu0 0.0
        %1057 = vmatprep.subr.mxu0 0.0
        %1058 = vmatpush1.msra.mxu0 0.0
        %1059 = vmatprep.subr.mxu0 0.0
        %1060 = vmatpush1.msra.mxu0 0.0
        %1061 = vmatprep.subr.mxu0 0.0
        %1062 = vmatpush1.msra.mxu0 0.0
        %1063 = vmatprep.subr.mxu0 0.0
        %1064 = vmatpush1.msra.mxu0 0.0
        %1065 = vmatprep.subr.mxu0 0.0
        %1066 = vmatpush1.msra.mxu0 0.0
        %1067 = vmatprep.subr.mxu0 0.0
        %1068 = vmatpush1.msra.mxu0 0.0
        %1069 = vmatprep.subr.mxu0 0.0
        %1070 = vmatpush1.msra.mxu0 0.0
        %1071 = vmatprep.subr.mxu0 0.0
        %1072 = vmatpush1.msra.mxu0 0.0
        %1073 = vmatprep.subr.mxu0 0.0
        %1074 = vmatpush1.msra.mxu0 0.0
        %1075 = vmatprep.subr.mxu0 0.0
        %1076 = vmatpush1.msra.mxu0 0.0
        %1077 = vmatprep.subr.mxu0 0.0
        %1078 = vmatpush1.msra.mxu0 0.0
        %1079 = vmatprep.subr.mxu0 0.0
        %1080 = vmatpush1.msra.mxu0 0.0
        %1081 = vmatprep.subr.mxu0 0.0
        %1082 = vmatpush1.msra.mxu0 %v899
        %1083 = vmatprep.subr.mxu0 0.0
        %1084 = vmatpush1.msra.mxu0 %v898
        %1085 = vmatprep.subr.mxu0 0.0
        %1086 = vmatpush2.msra.mxu0 0.0
        %1087 = vmatprep.subr.mxu0 0.0
        %1088 = vmatpush2.msra.mxu0 0.0
        %1089 = vmatprep.subr.mxu0 0.0
        %1090 = vmatpush2.msra.mxu0 0.0
        %1091 = vmatprep.subr.mxu0 0.0
        %1092 = vmatpush2.msra.mxu0 0.0
        %1093 = vmatprep.subr.mxu0 0.0
        %1094 = vmatpush2.msra.mxu0 0.0
        %1095 = vmatprep.subr.mxu0 0.0
        %1096 = vmatpush2.msra.mxu0 0.0
        %1097 = vmatprep.subr.mxu0 0.0
        %1098 = vmatpush2.msra.mxu0 0.0
        %1099 = vmatprep.subr.mxu0 0.0
        %1100 = vmatpush2.msra.mxu0 0.0
        %1101 = vmatprep.subr.mxu0 0.0
        %1102 = vmatpush2.msra.mxu0 0.0
        %1103 = vmatprep.subr.mxu0 0.0
        %1104 = vmatpush2.msra.mxu0 0.0
        %1105 = vmatprep.subr.mxu0 0.0
        %1106 = vmatpush2.msra.mxu0 0.0
        %1107 = vmatprep.subr.mxu0 0.0
        %1108 = vmatpush2.msra.mxu0 0.0
        %1109 = vmatprep.subr.mxu0 0.0
        %1110 = vmatpush2.msra.mxu0 0.0
        %1111 = vmatprep.subr.mxu0 0.0
        %1112 = vmatpush2.msra.mxu0 0.0
        %1113 = vmatprep.subr.mxu0 0.0
        %1114 = vmatpush2.msra.mxu0 0.0
        %1115 = vmatprep.subr.mxu0 0.0
        %1116 = vmatpush2.msra.mxu0 0.0
        %1117 = vmatprep.mubr.f32.mxu0 0.0
        %1118 = vmatmul.mubr.f32.gmra.mxu0 %v911
        %v1119 = vpop.f32.mrf.mxu0
        %v1120 = vadd.f32 %v907, %v1119
        %v1121 = vpop.f32.mrf.mxu0
        %1122 = vdwg.mxu0
        %1123 = vmatprep.subr.mxu0 0.0
        %1124 = vmatpush1.msra.mxu0 0.0
        %1125 = vmatprep.subr.mxu0 0.0
        %1126 = vmatpush1.msra.mxu0 0.0
        %1127 = vmatprep.subr.mxu0 0.0
        %1128 = vmatpush1.msra.mxu0 0.0
        %1129 = vmatprep.subr.mxu0 0.0
        %1130 = vmatpush1.msra.mxu0 0.0
        %1131 = vmatprep.subr.mxu0 0.0
        %1132 = vmatpush1.msra.mxu0 0.0
        %1133 = vmatprep.subr.mxu0 0.0
        %1134 = vmatpush1.msra.mxu0 0.0
        %1135 = vmatprep.subr.mxu0 0.0
        %1136 = vmatpush1.msra.mxu0 0.0
        %1137 = vmatprep.subr.mxu0 0.0
        %1138 = vmatpush1.msra.mxu0 0.0
        %1139 = vmatprep.subr.mxu0 0.0
        %1140 = vmatpush1.msra.mxu0 0.0
        %1141 = vmatprep.subr.mxu0 0.0
        %1142 = vmatpush1.msra.mxu0 0.0
        %1143 = vmatprep.subr.mxu0 0.0
        %1144 = vmatpush1.msra.mxu0 0.0
        %1145 = vmatprep.subr.mxu0 0.0
        %1146 = vmatpush1.msra.mxu0 0.0
        %1147 = vmatprep.subr.mxu0 0.0
        %1148 = vmatpush1.msra.mxu0 0.0
        %1149 = vmatprep.subr.mxu0 0.0
        %1150 = vmatpush1.msra.mxu0 0.0
        %1151 = vmatprep.subr.mxu0 0.0
        %1152 = vmatpush1.msra.mxu0 %v901
        %1153 = vmatprep.subr.mxu0 0.0
        %1154 = vmatpush1.msra.mxu0 %v900
        %1155 = vmatprep.subr.mxu0 0.0
        %1156 = vmatpush2.msra.mxu0 0.0
        %1157 = vmatprep.subr.mxu0 0.0
        %1158 = vmatpush2.msra.mxu0 0.0
        %1159 = vmatprep.subr.mxu0 0.0
        %1160 = vmatpush2.msra.mxu0 0.0
        %1161 = vmatprep.subr.mxu0 0.0
        %1162 = vmatpush2.msra.mxu0 0.0
        %1163 = vmatprep.subr.mxu0 0.0
        %1164 = vmatpush2.msra.mxu0 0.0
        %1165 = vmatprep.subr.mxu0 0.0
        %1166 = vmatpush2.msra.mxu0 0.0
        %1167 = vmatprep.subr.mxu0 0.0
        %1168 = vmatpush2.msra.mxu0 0.0
        %1169 = vmatprep.subr.mxu0 0.0
        %1170 = vmatpush2.msra.mxu0 0.0
        %1171 = vmatprep.subr.mxu0 0.0
        %1172 = vmatpush2.msra.mxu0 0.0
        %1173 = vmatprep.subr.mxu0 0.0
        %1174 = vmatpush2.msra.mxu0 0.0
        %1175 = vmatprep.subr.mxu0 0.0
        %1176 = vmatpush2.msra.mxu0 0.0
        %1177 = vmatprep.subr.mxu0 0.0
        %1178 = vmatpush2.msra.mxu0 0.0
        %1179 = vmatprep.subr.mxu0 0.0
        %1180 = vmatpush2.msra.mxu0 0.0
        %1181 = vmatprep.subr.mxu0 0.0
        %1182 = vmatpush2.msra.mxu0 0.0
        %1183 = vmatprep.subr.mxu0 0.0
        %1184 = vmatpush2.msra.mxu0 0.0
        %1185 = vmatprep.subr.mxu0 0.0
        %1186 = vmatpush2.msra.mxu0 0.0
        %1187 = vmatprep.mubr.f32.mxu0 0.0
        %1188 = vmatmul.mubr.f32.gmra.mxu0 %v911
        %v1189 = vpop.f32.mrf.mxu0
        %v1190 = vadd.f32 %v907, %v1189
        %v1191 = vpop.f32.mrf.mxu0
        %1192 = vdwg.mxu0
        %v1193 = vadd.f32 %v461, %v980
        %v1194 = vadd.f32 %v462, %v1050
        %v1195 = vadd.f32 %v463, %v1120
        %v1196 = vadd.f32 %v464, %v1190
        %v1197 = vld [vmem:[%s7] sm:$0x1]
        %v1198 = vld [vmem:[%s8] sm:$0x1]
        %v1199 = vsel %vm467, %v1193, 0.0
        %1200 = vadd.xlane.f32.xlu0 %v1199
        %v1201 = vpop.xlane.xlu0 %1200
        %v1202 = vsel %vm467, %v1194, 0.0
        %1203 = vadd.xlane.f32.xlu0 %v1202
        %v1204 = vpop.xlane.xlu0 %1203
        %v1205 = vsel %vm467, %v1195, 0.0
        %1206 = vadd.xlane.f32.xlu0 %v1205
        %v1207 = vpop.xlane.xlu0 %1206
        %v1208 = vsel %vm467, %v1196, 0.0
        %1209 = vadd.xlane.f32.xlu0 %v1208
        %v1210 = vpop.xlane.xlu0 %1209
        %v1211 = vmul.f32 %v1201, %v480
        %v1212 = vmul.f32 %v1204, %v480
        %v1213 = vmul.f32 %v1207, %v480
        %v1214 = vmul.f32 %v1210, %v480
        %v1215 = vsub.f32 %v1193, %v1211
        %v1216 = vsub.f32 %v1194, %v1212
        %v1217 = vsub.f32 %v1195, %v1213
        %v1218 = vsub.f32 %v1196, %v1214
        %v1219 = vmul.f32 %v1215, %v1215
        %v1220 = vmul.f32 %v1216, %v1216
        %v1221 = vmul.f32 %v1217, %v1217
        %v1222 = vmul.f32 %v1218, %v1218
        %v1223 = vsel %vm467, %v1219, 0.0
        %1224 = vadd.xlane.f32.xlu0 %v1223
        %v1225 = vpop.xlane.xlu0 %1224
        %v1226 = vsel %vm467, %v1220, 0.0
        %1227 = vadd.xlane.f32.xlu0 %v1226
        %v1228 = vpop.xlane.xlu0 %1227
        %v1229 = vsel %vm467, %v1221, 0.0
        %1230 = vadd.xlane.f32.xlu0 %v1229
        %v1231 = vpop.xlane.xlu0 %1230
        %v1232 = vsel %vm467, %v1222, 0.0
        %1233 = vadd.xlane.f32.xlu0 %v1232
        %v1234 = vpop.xlane.xlu0 %1233
        %v1235 = vmul.f32 %v1225, %v480
        %v1236 = vmul.f32 %v1228, %v480
        %v1237 = vmul.f32 %v1231, %v480
        %v1238 = vmul.f32 %v1234, %v480
        %v1239 = vadd.f32 %v1235, 1e-05
        %v1240 = vadd.f32 %v1236, 1e-05
        %v1241 = vadd.f32 %v1237, 1e-05
        %v1242 = vadd.f32 %v1238, 1e-05
        %v1243 = vrsqrt.pop %v1239
        %v1244 = vrsqrt.pop %v1240
        %v1245 = vrsqrt.pop %v1241
        %v1246 = vrsqrt.pop %v1242
        %v1247 = vmul.f32 %v1215, %v1243
        %v1248 = vmul.f32 %v1216, %v1244
        %v1249 = vmul.f32 %v1217, %v1245
        %v1250 = vmul.f32 %v1218, %v1246
        %v1252 = vlaneseq
        %v1253 = vshrl.u32 %v1252, 7
        %v1254 = vsub.s32 0, %v1253
        %v1255 = vrot.slane %v1197, %v1254
        %v1257 = vmul.f32 %v1247, %v1255
        %v1258 = vmul.f32 %v1248, %v1255
        %v1259 = vmul.f32 %v1249, %v1255
        %v1260 = vmul.f32 %v1250, %v1255
        %v1262 = vlaneseq
        %v1263 = vshrl.u32 %v1262, 7
        %v1264 = vsub.s32 0, %v1263
        %v1265 = vrot.slane %v1198, %v1264
        %v1267 = vadd.f32 %v1257, %v1265
        %v1268 = vadd.f32 %v1258, %v1265
        %v1269 = vadd.f32 %v1259, %v1265
        %v1270 = vadd.f32 %v1260, %v1265
        %v1271 = vld [vmem:[%s9] sm:$0xff]
        %v1272 = vld [vmem:[%s9 + $0x8] sm:$0xff]
        %v1273 = vld [vmem:[%s9 + $0x10] sm:$0xff]
        %v1274 = vld [vmem:[%s9 + $0x18] sm:$0xff]
        %v1275 = vld [vmem:[%s10] sm:$0x1]
        %v1277 = vlaneseq
        %v1278 = vshrl.u32 %v1277, 7
        %v1279 = vsub.s32 0, %v1278
        %v1280 = vrot.slane %v1275, %v1279
        %v1283 = vsel %vm467, %v1267, 0
        %v1286 = vsel %vm467, %v1268, 0
        %v1289 = vsel %vm467, %v1269, 0
        %v1292 = vsel %vm467, %v1270, 0
        %1294 = vmatprep.subr.mxu0 0.0
        %1295 = vmatpush1.msra.mxu0 0.0
        %1296 = vmatprep.subr.mxu0 0.0
        %1297 = vmatpush1.msra.mxu0 0.0
        %1298 = vmatprep.subr.mxu0 0.0
        %1299 = vmatpush1.msra.mxu0 0.0
        %1300 = vmatprep.subr.mxu0 0.0
        %1301 = vmatpush1.msra.mxu0 0.0
        %1302 = vmatprep.subr.mxu0 0.0
        %1303 = vmatpush1.msra.mxu0 0.0
        %1304 = vmatprep.subr.mxu0 0.0
        %1305 = vmatpush1.msra.mxu0 0.0
        %1306 = vmatprep.subr.mxu0 0.0
        %1307 = vmatpush1.msra.mxu0 0.0
        %1308 = vmatprep.subr.mxu0 0.0
        %1309 = vmatpush1.msra.mxu0 0.0
        %1310 = vmatprep.subr.mxu0 0.0
        %1311 = vmatpush1.msra.mxu0 0.0
        %1312 = vmatprep.subr.mxu0 0.0
        %1313 = vmatpush1.msra.mxu0 0.0
        %1314 = vmatprep.subr.mxu0 0.0
        %1315 = vmatpush1.msra.mxu0 0.0
        %1316 = vmatprep.subr.mxu0 0.0
        %1317 = vmatpush1.msra.mxu0 0.0
        %1318 = vmatprep.subr.mxu0 0.0
        %1319 = vmatpush1.msra.mxu0 %v1274
        %1320 = vmatprep.subr.mxu0 0.0
        %1321 = vmatpush1.msra.mxu0 %v1273
        %1322 = vmatprep.subr.mxu0 0.0
        %1323 = vmatpush1.msra.mxu0 %v1272
        %1324 = vmatprep.subr.mxu0 0.0
        %1325 = vmatpush1.msra.mxu0 %v1271
        %1326 = vmatprep.subr.mxu0 0.0
        %1327 = vmatpush2.msra.mxu0 0.0
        %1328 = vmatprep.subr.mxu0 0.0
        %1329 = vmatpush2.msra.mxu0 0.0
        %1330 = vmatprep.subr.mxu0 0.0
        %1331 = vmatpush2.msra.mxu0 0.0
        %1332 = vmatprep.subr.mxu0 0.0
        %1333 = vmatpush2.msra.mxu0 0.0
        %1334 = vmatprep.subr.mxu0 0.0
        %1335 = vmatpush2.msra.mxu0 0.0
        %1336 = vmatprep.subr.mxu0 0.0
        %1337 = vmatpush2.msra.mxu0 0.0
        %1338 = vmatprep.subr.mxu0 0.0
        %1339 = vmatpush2.msra.mxu0 0.0
        %1340 = vmatprep.subr.mxu0 0.0
        %1341 = vmatpush2.msra.mxu0 0.0
        %1342 = vmatprep.subr.mxu0 0.0
        %1343 = vmatpush2.msra.mxu0 0.0
        %1344 = vmatprep.subr.mxu0 0.0
        %1345 = vmatpush2.msra.mxu0 0.0
        %1346 = vmatprep.subr.mxu0 0.0
        %1347 = vmatpush2.msra.mxu0 0.0
        %1348 = vmatprep.subr.mxu0 0.0
        %1349 = vmatpush2.msra.mxu0 0.0
        %1350 = vmatprep.subr.mxu0 0.0
        %1351 = vmatpush2.msra.mxu0 0.0
        %1352 = vmatprep.subr.mxu0 0.0
        %1353 = vmatpush2.msra.mxu0 0.0
        %1354 = vmatprep.subr.mxu0 0.0
        %1355 = vmatpush2.msra.mxu0 0.0
        %1356 = vmatprep.subr.mxu0 0.0
        %1357 = vmatpush2.msra.mxu0 0.0
        %1358 = vmatprep.mubr.f32.mxu0 0.0
        %1359 = vmatmul.mubr.f32.gmra.mxu0 %v1283
        %v1360 = vpop.f32.mrf.mxu0
        %v1361 = vadd.f32 %v1280, %v1360
        %v1362 = vpop.f32.mrf.mxu0
        %1363 = vmatprep.mubr.f32.mxu0 0.0
        %1364 = vmatmul.mubr.f32.gmra.mxu0 %v1286
        %v1365 = vpop.f32.mrf.mxu0
        %v1366 = vadd.f32 %v1280, %v1365
        %v1367 = vpop.f32.mrf.mxu0
        %1368 = vmatprep.mubr.f32.mxu0 0.0
        %1369 = vmatmul.mubr.f32.gmra.mxu0 %v1289
        %v1370 = vpop.f32.mrf.mxu0
        %v1371 = vadd.f32 %v1280, %v1370
        %v1372 = vpop.f32.mrf.mxu0
        %1373 = vmatprep.mubr.f32.mxu0 0.0
        %1374 = vmatmul.mubr.f32.gmra.mxu0 %v1292
        %v1375 = vpop.f32.mrf.mxu0
        %v1376 = vadd.f32 %v1280, %v1375
        %v1377 = vpop.f32.mrf.mxu0
        %1378 = vdwg.mxu0
        %v1379 = vmul.f32 %v1361, 0.5
        %v1380 = vmul.f32 %v1366, 0.5
        %v1381 = vmul.f32 %v1371, 0.5
        %v1382 = vmul.f32 %v1376, 0.5
        %v1383 = vmul.f32 %v1361, 0.70710677
        %v1384 = vmul.f32 %v1366, 0.70710677
        %v1385 = vmul.f32 %v1371, 0.70710677
        %v1386 = vmul.f32 %v1376, 0.70710677
        %v1387 = verf.f32.pop %v1383
        %v1388 = verf.f32.pop %v1384
        %v1389 = verf.f32.pop %v1385
        %v1390 = verf.f32.pop %v1386
        %v1391 = vadd.f32 %v1387, 1.0
        %v1392 = vadd.f32 %v1388, 1.0
        %v1393 = vadd.f32 %v1389, 1.0
        %v1394 = vadd.f32 %v1390, 1.0
        %v1395 = vmul.f32 %v1379, %v1391
        %v1396 = vmul.f32 %v1380, %v1392
        %v1397 = vmul.f32 %v1381, %v1393
        %v1398 = vmul.f32 %v1382, %v1394
        %v1399 = vld [vmem:[%s11] sm:$0xff]
        %v1400 = vld [vmem:[%s11 + $0x8] sm:$0xff]
        %v1401 = vld [vmem:[%s11 + $0x10] sm:$0xff]
        %v1402 = vld [vmem:[%s11 + $0x18] sm:$0xff]
        %v1403 = vld [vmem:[%s11 + $0x20] sm:$0xff]
        %v1404 = vld [vmem:[%s11 + $0x28] sm:$0xff]
        %v1405 = vld [vmem:[%s11 + $0x30] sm:$0xff]
        %v1406 = vld [vmem:[%s11 + $0x38] sm:$0xff]
        %v1407 = vld [vmem:[%s11 + $0x40] sm:$0xff]
        %v1408 = vld [vmem:[%s11 + $0x48] sm:$0xff]
        %v1409 = vld [vmem:[%s11 + $0x50] sm:$0xff]
        %v1410 = vld [vmem:[%s11 + $0x58] sm:$0xff]
        %v1411 = vld [vmem:[%s11 + $0x60] sm:$0xff]
        %v1412 = vld [vmem:[%s11 + $0x68] sm:$0xff]
        %v1413 = vld [vmem:[%s11 + $0x70] sm:$0xff]
        %v1414 = vld [vmem:[%s11 + $0x78] sm:$0xff]
        %v1415 = vld [vmem:[%s12] sm:$0x1]
        %v1417 = vlaneseq
        %v1418 = vshrl.u32 %v1417, 7
        %v1419 = vsub.s32 0, %v1418
        %v1420 = vrot.slane %v1415, %v1419
        %1422 = vmatprep.subr.mxu0 0.0
        %1423 = vmatpush1.msra.mxu0 %v1414
        %1424 = vmatprep.subr.mxu0 0.0
        %1425 = vmatpush1.msra.mxu0 %v1413
        %1426 = vmatprep.subr.mxu0 0.0
        %1427 = vmatpush1.msra.mxu0 %v1412
        %1428 = vmatprep.subr.mxu0 0.0
        %1429 = vmatpush1.msra.mxu0 %v1411
        %1430 = vmatprep.subr.mxu0 0.0
        %1431 = vmatpush1.msra.mxu0 %v1410
        %1432 = vmatprep.subr.mxu0 0.0
        %1433 = vmatpush1.msra.mxu0 %v1409
        %1434 = vmatprep.subr.mxu0 0.0
        %1435 = vmatpush1.msra.mxu0 %v1408
        %1436 = vmatprep.subr.mxu0 0.0
        %1437 = vmatpush1.msra.mxu0 %v1407
        %1438 = vmatprep.subr.mxu0 0.0
        %1439 = vmatpush1.msra.mxu0 %v1406
        %1440 = vmatprep.subr.mxu0 0.0
        %1441 = vmatpush1.msra.mxu0 %v1405
        %1442 = vmatprep.subr.mxu0 0.0
        %1443 = vmatpush1.msra.mxu0 %v1404
        %1444 = vmatprep.subr.mxu0 0.0
        %1445 = vmatpush1.msra.mxu0 %v1403
        %1446 = vmatprep.subr.mxu0 0.0
        %1447 = vmatpush1.msra.mxu0 %v1402
        %1448 = vmatprep.subr.mxu0 0.0
        %1449 = vmatpush1.msra.mxu0 %v1401
        %1450 = vmatprep.subr.mxu0 0.0
        %1451 = vmatpush1.msra.mxu0 %v1400
        %1452 = vmatprep.subr.mxu0 0.0
        %1453 = vmatpush1.msra.mxu0 %v1399
        %1454 = vmatprep.subr.mxu0 0.0
        %1455 = vmatpush2.msra.mxu0 0.0
        %1456 = vmatprep.subr.mxu0 0.0
        %1457 = vmatpush2.msra.mxu0 0.0
        %1458 = vmatprep.subr.mxu0 0.0
        %1459 = vmatpush2.msra.mxu0 0.0
        %1460 = vmatprep.subr.mxu0 0.0
        %1461 = vmatpush2.msra.mxu0 0.0
        %1462 = vmatprep.subr.mxu0 0.0
        %1463 = vmatpush2.msra.mxu0 0.0
        %1464 = vmatprep.subr.mxu0 0.0
        %1465 = vmatpush2.msra.mxu0 0.0
        %1466 = vmatprep.subr.mxu0 0.0
        %1467 = vmatpush2.msra.mxu0 0.0
        %1468 = vmatprep.subr.mxu0 0.0
        %1469 = vmatpush2.msra.mxu0 0.0
        %1470 = vmatprep.subr.mxu0 0.0
        %1471 = vmatpush2.msra.mxu0 0.0
        %1472 = vmatprep.subr.mxu0 0.0
        %1473 = vmatpush2.msra.mxu0 0.0
        %1474 = vmatprep.subr.mxu0 0.0
        %1475 = vmatpush2.msra.mxu0 0.0
        %1476 = vmatprep.subr.mxu0 0.0
        %1477 = vmatpush2.msra.mxu0 0.0
        %1478 = vmatprep.subr.mxu0 0.0
        %1479 = vmatpush2.msra.mxu0 0.0
        %1480 = vmatprep.subr.mxu0 0.0
        %1481 = vmatpush2.msra.mxu0 0.0
        %1482 = vmatprep.subr.mxu0 0.0
        %1483 = vmatpush2.msra.mxu0 0.0
        %1484 = vmatprep.subr.mxu0 0.0
        %1485 = vmatpush2.msra.mxu0 0.0
        %1486 = vmatprep.mubr.f32.mxu0 0.0
        %1487 = vmatmul.mubr.f32.gmra.mxu0 %v1395
        %v1488 = vpop.f32.mrf.mxu0
        %v1489 = vadd.f32 %v1420, %v1488
        %v1490 = vpop.f32.mrf.mxu0
        %1491 = vmatprep.mubr.f32.mxu0 0.0
        %1492 = vmatmul.mubr.f32.gmra.mxu0 %v1396
        %v1493 = vpop.f32.mrf.mxu0
        %v1494 = vadd.f32 %v1420, %v1493
        %v1495 = vpop.f32.mrf.mxu0
        %1496 = vmatprep.mubr.f32.mxu0 0.0
        %1497 = vmatmul.mubr.f32.gmra.mxu0 %v1397
        %v1498 = vpop.f32.mrf.mxu0
        %v1499 = vadd.f32 %v1420, %v1498
        %v1500 = vpop.f32.mrf.mxu0
        %1501 = vmatprep.mubr.f32.mxu0 0.0
        %1502 = vmatmul.mubr.f32.gmra.mxu0 %v1398
        %v1503 = vpop.f32.mrf.mxu0
        %v1504 = vadd.f32 %v1420, %v1503
        %v1505 = vpop.f32.mrf.mxu0
        %1506 = vdwg.mxu0
        %v1507 = vadd.f32 %v1193, %v1489
        %v1508 = vadd.f32 %v1194, %v1494
        %v1509 = vadd.f32 %v1195, %v1499
        %v1510 = vadd.f32 %v1196, %v1504
        %1511 = vst.msk [vmem:[%s458] sm:$0xff] %vm467, %v1507
        %1512 = vst.msk [vmem:[%s458 + $0x8] sm:$0xff] %vm467, %v1508
        %1513 = vst.msk [vmem:[%s458 + $0x10] sm:$0xff] %vm467, %v1509
        %1514 = vst.msk [vmem:[%s458 + $0x18] sm:$0xff] %vm467, %v1510
        %s1515 = sand.u32 %s316, 1
        %s1516 = scalar_lea.sflag [#allocation4], %s1515
        %s1517 = sand.u32 %s316, 1
        %s1518 = smul.addr %s1517, 32
        %s1519 = scalar_lea.vmem [#allocation5], %s1518
        // Predicated region
        $region77: #{tpu_custom_call.1} parent=71 // pred_check
          %p1520 = pneg %p326
        $region78: #{tpu_custom_call.1} parent=71 // pred_check_branch
          %1522 = sbr.rel (%p1520) target = $region80
        $region79: #{tpu_custom_call.1} parent=71 // pred_region
          %s1523 = smul.u32 4, %s30
          %s1525 = ssub.s32 512, 512
          %1526 = vsyncadd %s1516, %s1525
          %s1527 = smul.addr %s1523, 128
          %s1528 = scalar_lea.hbm %s13, %s1527
          %s1529 = sshll.u32 %s1519, 4
          %s1530 = int_to_ptr.vmem [resolvable:$true] %s1529
          %1535 = dma.vmem_to_hbm [thread:$0]  %s1530, 512, %s1528, %s1516, 128, 128, 8
        $region80: #{tpu_custom_call.1} parent=71 // pred_fallthru
          _
      $region72: #{tpu_custom_call.1} parent=5 // pred_fallthru
        _
      %p1536 = scmp.le.s32.totalorder 2, %s25
      // Predicated region
      $region81: #{tpu_custom_call.1} parent=5 // pred_check
        %p1537 = pneg %p1536
      $region82: #{tpu_custom_call.1} parent=5 // pred_check_branch
        %1539 = sbr.rel (%p1537) target = $region84
      $region83: #{tpu_custom_call.1} parent=5 // pred_region
        %s1540 = ssub.s32 %s25, 2
        // Predicated region
        $region85: #{tpu_custom_call.1} parent=83 // pred_check
          %p1541 = pneg %p332
        $region86: #{tpu_custom_call.1} parent=83 // pred_check_branch
          %1543 = sbr.rel (%p1541) target = $region88
        $region87: #{tpu_custom_call.1} parent=83 // pred_region
          %s1544 = sand.u32 %s317, 1
          %s1545 = scalar_lea.sflag [#allocation4], %s1544
          %s1546 = sand.u32 %s317, 1
          %s1547 = smul.addr %s1546, 32
          %s1548 = scalar_lea.vmem [#allocation5], %s1547
          %1549 = dma.done %s1545, 512
        $region88: #{tpu_custom_call.1} parent=83 // pred_fallthru
          _
      $region84: #{tpu_custom_call.1} parent=5 // pred_fallthru
        _
    $region6: #{tpu_custom_call.1} parent=1 // loop_footer
      %s29 = sadd.s32 1, %s25
    $region7: #{tpu_custom_call.1} parent=1 // loop_footer_branch
      %24 = sbr.rel target = $region3
    $region8: #{tpu_custom_call.1} parent=1 // loop_exit
      _
    %1550 = vsyncpa [#allocation3], 1
    %s1551 = scalar_lea.sflag [#allocation3], 1
    %1552 = vsyncpa %s1551, 1
    %1553 = vsyncpa [#allocation4], 1
    %s1554 = scalar_lea.sflag [#allocation4], 1
    %1555 = vsyncpa %s1554, 1

</llo_original>
